<compile_context>
chip_gen: v7x
topology: tpu7x:2x2x1
jax: 0.10.0
libtpu: 0.0.40
codegen_flags: <defaults>
</compile_context>

<pallas_src>
import jax
import jax.numpy as jnp
from jax import lax
from jax.experimental import pallas as pl
from jax.experimental.pallas import tpu as pltpu


def _round_up(x, m):
    return (x + m - 1) // m * m


def _lstm_v2_kernel(x_ref, w_in_ref, b_in_ref, w_hh_ref, out_ref, gx_scr):
    """Fused fc1 + LSTM forward for one batch chunk.

    x_ref    : (T, Bc, E)     time-major inputs for this batch chunk
    w_in_ref : (E, 4*Hp)      fused input projection W1^T @ W_ih^T (gate-padded)
    b_in_ref : (1, 4*Hp)      fused bias b1 @ W_ih^T + b_ih + b_hh (gate-padded)
    w_hh_ref : (Hp, 4*Hp)     recurrent weights W_hh^T (gate-padded)
    out_ref  : (Bc, Hp)       final hidden state for this chunk
    gx_scr   : (T, Bc, 4*Hp)  VMEM scratch: precomputed input-side gates
    """
    T, Bc, E = x_ref.shape
    Hp = out_ref.shape[-1]

    # ---- Phase 1: all x-dependent work as ONE large, well-shaped matmul. ----
    x_all = x_ref[...].reshape(T * Bc, E)                       # tile-aligned merge
    gx = (jnp.dot(x_all, w_in_ref[...], preferred_element_type=jnp.float32)
          + b_in_ref[...])                                      # (T*Bc, 4*Hp)
    gx_scr[...] = gx.reshape(T, Bc, 4 * Hp)

    # ---- Phase 2: serial recurrence; one small matmul + elementwise / step. ----
    def step(t, carry):
        h, c = carry
        gates = gx_scr[t] + jnp.dot(h, w_hh_ref[...],
                                    preferred_element_type=jnp.float32)
        # Lane-aligned gate slices (Hp % 128 == 0): i, f, g, o.
        i_g = jax.nn.sigmoid(gates[:, 0 * Hp:1 * Hp])
        f_g = jax.nn.sigmoid(gates[:, 1 * Hp:2 * Hp])
        g_g = jnp.tanh(gates[:, 2 * Hp:3 * Hp])
        o_g = jax.nn.sigmoid(gates[:, 3 * Hp:4 * Hp])
        c_new = f_g * c + i_g * g_g
        h_new = o_g * jnp.tanh(c_new)
        return h_new, c_new

    zeros = jnp.zeros((Bc, Hp), jnp.float32)
    h_last, _ = lax.fori_loop(0, T, step, (zeros, zeros), unroll=True)
    out_ref[...] = h_last


def _pad_gate_cols(w, H, Hp):
    """Regroup gate-major columns (K, 4H) -> (K, 4*Hp) with each gate block
    zero-padded to Hp columns (lane-block aligned)."""
    K = w.shape[0]
    out = jnp.zeros((K, 4, Hp), w.dtype)
    out = out.at[:, :, :H].set(w.reshape(K, 4, H))
    return out.reshape(K, 4 * Hp)


def vis_seq_encoder_v2(x_bte, params, *, block_b=8):
    """x_bte: (B, T, E) float32 (PyTorch batch-first layout).
    Returns (B, H) final LSTM hidden state, matching hidden[0].squeeze()."""
    B, T, E = x_bte.shape
    H = params["b1"].shape[0]
    Hp = _round_up(H, 128)                  # lane-aligned hidden dim
    Bc = max(8, block_b)                    # sublane-aligned batch chunk
    Bp = _round_up(max(B, Bc), Bc)
    n_chunks = Bp // Bc

    hi = lax.Precision.HIGHEST

    # Fold fc1 into the LSTM input projection (done once, outside recurrence):
    #   gates_x = x @ (W1^T @ W_ih^T) + (b1 @ W_ih^T + b_ih + b_hh)
    w_in = jnp.dot(params["w1"].T, params["w_ih"].T, precision=hi)            # (E, 4H)
    b_in = (jnp.dot(params["b1"], params["w_ih"].T, precision=hi)
            + params["b_ih"] + params["b_hh"])                                # (4H,)
    w_hh = params["w_hh"].T                                                   # (H, 4H)

    # Gate-pad to lane-block-aligned layout. Padded gate columns see zero
    # weights/bias, so their c stays 0 and h stays 0 for all t (no leakage).
    w_in_p = _pad_ate = _pad_gate_cols(w_in, H, Hp)                           # (E, 4Hp)
    b_in_p = _pad_gate_cols(b_in.reshape(1, 4 * H), H, Hp)                    # (1, 4Hp)
    w_hh_p = jnp.zeros((Hp, 4 * Hp), jnp.float32).at[:H].set(
        _pad_gate_cols(w_hh, H, Hp))                                          # (Hp, 4Hp)

    # Time-major, batch-padded input (padded batch rows are independent junk,
    # sliced off below).
    x_tbe = jnp.zeros((T, Bp, E), jnp.float32).at[:, :B, :].set(
        jnp.transpose(x_bte, (1, 0, 2)))

    out = pl.pallas_call(
        _lstm_v2_kernel,
        out_shape=jax.ShapeDtypeStruct((Bp, Hp), jnp.float32),
        grid_spec=pltpu.PrefetchScalarGridSpec(
            num_scalar_prefetch=0,
            grid=(n_chunks,),                                  # independent batch chunks
            in_specs=[
                pl.BlockSpec((T, Bc, E), lambda b: (0, b, 0)),     # x chunk
                pl.BlockSpec((E, 4 * Hp), lambda b: (0, 0)),       # fused W_in
                pl.BlockSpec((1, 4 * Hp), lambda b: (0, 0)),       # fused bias
                pl.BlockSpec((Hp, 4 * Hp), lambda b: (0, 0)),      # W_hh^T
            ],
            out_specs=pl.BlockSpec((Bc, Hp), lambda b: (b, 0)),
            scratch_shapes=[pltpu.VMEM((T, Bc, 4 * Hp), jnp.float32)],
        ),
        compiler_params=pltpu.CompilerParams(
            dimension_semantics=("parallel",),                 # megacore on v7x
            vmem_limit_bytes=32 * 1024 * 1024),
    )(x_tbe, w_in_p, b_in_p, w_hh_p)
    return out[:B, :H]

    # TODO(synk): wordLeg != None branch (gather lstmOut at wordLeg[i]-1) not
    # implemented; it would require returning the full (B,T,H) lstmOut and a
    # scalar-prefetch gather.


def _reference(x_bte, params):
    """Pure-JAX reference (lax.scan) reproducing PyTorch LSTM semantics in f32."""
    H = params["b1"].shape[0]
    hi = lax.Precision.HIGHEST
    z = jnp.einsum("bte,he->bth", x_bte, params["w1"], precision=hi) + params["b1"]

    def step(carry, z_t):
        h, c = carry
        gates = (jnp.dot(z_t, params["w_ih"].T, precision=hi) + params["b_ih"]
                 + jnp.dot(h, params["w_hh"].T, precision=hi) + params["b_hh"])
        i = jax.nn.sigmoid(gates[:, 0 * H:1 * H])
        f = jax.nn.sigmoid(gates[:, 1 * H:2 * H])
        g = jnp.tanh(gates[:, 2 * H:3 * H])
        o = jax.nn.sigmoid(gates[:, 3 * H:4 * H])
        c = f * c + i * g
        h = o * jnp.tanh(c)
        return (h, c), h

    B = x_bte.shape[0]
    h0 = jnp.zeros((B, H), jnp.float32)
    c0 = jnp.zeros((B, H), jnp.float32)
    (h_last, _), _ = lax.scan(step, (h0, c0), jnp.transpose(z, (1, 0, 2)))
    return h_last


if __name__ == "__main__":
    B, T, E, H = 2, 8, 16, 32  # batch, seq, embedDim, hidden_dim

    key = jax.random.PRNGKey(0)
    ks = jax.random.split(key, 7)
    scale = 0.1
    params = {
        "w1":   scale * jax.random.normal(ks[0], (H, E), jnp.float32),       # fc1.weight
        "b1":   scale * jax.random.normal(ks[1], (H,), jnp.float32),         # fc1.bias
        "w_ih": scale * jax.random.normal(ks[2], (4 * H, H), jnp.float32),   # lstm.weight_ih_l0
        "w_hh": scale * jax.random.normal(ks[3], (4 * H, H), jnp.float32),   # lstm.weight_hh_l0
        "b_ih": scale * jax.random.normal(ks[4], (4 * H,), jnp.float32),     # lstm.bias_ih_l0
        "b_hh": scale * jax.random.normal(ks[5], (4 * H,), jnp.float32),     # lstm.bias_hh_l0
    }
    x = jax.random.normal(ks[6], (B, T, E), jnp.float32)  # wordMatrixOri (B, T, embedDim)

    out = jax.block_until_ready(vis_seq_encoder_v2(x, params))
    ref = jax.block_until_ready(_reference(x, params))

    assert out.shape == (B, H), out.shape
    # Tolerance accounts for the fc1->W_ih fusion (matmul reassociation) and
    # TPU MXU f32 matmul precision differences vs. the HIGHEST-precision reference.
    assert jnp.allclose(out, ref, atol=2e-3, rtol=2e-3), (
        float(jnp.max(jnp.abs(out - ref))))
    print("KERNEL_OK")
</pallas_src>

<mosaic_0001>
module attributes {stable_mosaic.version = 11 : i64} {
  func.func @_lstm_v2_kernel(%arg0: i32, %arg1: memref<8x8x16xf32, #tpu.memory_space<vmem>>, %arg2: memref<16x512xf32, #tpu.memory_space<vmem>>, %arg3: memref<1x512xf32, #tpu.memory_space<vmem>>, %arg4: memref<128x512xf32, #tpu.memory_space<vmem>>, %arg5: memref<8x128xf32, #tpu.memory_space<vmem>>, %arg6: memref<8x8x512xf32, #tpu.memory_space<vmem>>) attributes {dimension_semantics = [#tpu.dimension_semantics<parallel>], iteration_bounds = array<i64: 1>, scalar_prefetch = 0 : i64, scratch_operands = 1 : i64, tpu.core_type = #tpu.core_type<tc>, window_params = [{transform_indices = @transform_0, window_bounds = array<i64: 8, 8, 16>}, {pipeline_mode = #tpu.pipeline_mode<synchronous>, transform_indices = @transform_1, window_bounds = array<i64: 16, 512>}, {pipeline_mode = #tpu.pipeline_mode<synchronous>, transform_indices = @transform_2, window_bounds = array<i64: 1, 512>}, {pipeline_mode = #tpu.pipeline_mode<synchronous>, transform_indices = @transform_3, window_bounds = array<i64: 128, 512>}, {transform_indices = @transform_4, window_bounds = array<i64: 8, 128>}]} {
    %c0 = arith.constant 0 : index
    %c0_0 = arith.constant 0 : index
    %c0_1 = arith.constant 0 : index
    %0 = vector.load %arg1[%c0, %c0_0, %c0_1] : memref<8x8x16xf32, #tpu.memory_space<vmem>>, vector<8x8x16xf32>
    %1 = vector.shape_cast %0 : vector<8x8x16xf32> to vector<64x16xf32>
    %c0_2 = arith.constant 0 : index
    %c0_3 = arith.constant 0 : index
    %2 = vector.load %arg2[%c0_2, %c0_3] : memref<16x512xf32, #tpu.memory_space<vmem>>, vector<16x512xf32>
    %cst = arith.constant dense<0.000000e+00> : vector<64x512xf32>
    %3 = tpu.matmul %1, %2, %cst {dimension_numbers = #tpu.dot_dimension_numbers<[1], [0], [0], [1], [0, 0, 1, 1], [], []>} : vector<64x16xf32>, vector<16x512xf32>, vector<64x512xf32> -> vector<64x512xf32>
    %c0_4 = arith.constant 0 : index
    %c0_5 = arith.constant 0 : index
    %4 = vector.load %arg3[%c0_4, %c0_5] : memref<1x512xf32, #tpu.memory_space<vmem>>, vector<1x512xf32>
    %5 = vector.broadcast %4 : vector<1x512xf32> to vector<64x512xf32>
    %6 = arith.addf %3, %5 : vector<64x512xf32>
    %7 = vector.shape_cast %6 : vector<64x512xf32> to vector<8x8x512xf32>
    %c0_6 = arith.constant 0 : index
    %c0_7 = arith.constant 0 : index
    %c0_8 = arith.constant 0 : index
    %8 = vector.load %arg6[%c0_6, %c0_7, %c0_8] : memref<8x8x512xf32, #tpu.memory_space<vmem>>, vector<8x8x512xf32>
    tpu.vector_store %arg6[%c0_6, %c0_7, %c0_8], %7 {strides = array<i32>} : memref<8x8x512xf32, #tpu.memory_space<vmem>>, vector<8x8x512xf32>,
    %cst_9 = arith.constant 0.000000e+00 : f32
    %9 = vector.broadcast %cst_9 : f32 to vector<8x128xf32>
    %c0_i32 = arith.constant 0 : i32
    %10 = arith.index_cast %c0_i32 : i32 to index
    %c0_10 = arith.constant 0 : index
    %c0_11 = arith.constant 0 : index
    %11 = vector.load %arg6[%10, %c0_10, %c0_11] : memref<8x8x512xf32, #tpu.memory_space<vmem>>, vector<1x8x512xf32>
    %12 = vector.shape_cast %11 : vector<1x8x512xf32> to vector<8x512xf32>
    %c0_12 = arith.constant 0 : index
    %c0_13 = arith.constant 0 : index
    %13 = vector.load %arg4[%c0_12, %c0_13] : memref<128x512xf32, #tpu.memory_space<vmem>>, vector<128x512xf32>
    %cst_14 = arith.constant dense<0.000000e+00> : vector<8x512xf32>
    %14 = tpu.matmul %9, %13, %cst_14 {dimension_numbers = #tpu.dot_dimension_numbers<[1], [0], [0], [1], [0, 0, 1, 1], [], []>} : vector<8x128xf32>, vector<128x512xf32>, vector<8x512xf32> -> vector<8x512xf32>
    %15 = arith.addf %12, %14 : vector<8x512xf32>
    %16 = vector.extract_strided_slice %15 {offsets = [0, 0], sizes = [8, 128], strides = [1, 1]} : vector<8x512xf32> to vector<8x128xf32>
    %17 = arith.negf %16 : vector<8x128xf32>
    %18 = math.exp %17 : vector<8x128xf32>
    %cst_15 = arith.constant 1.000000e+00 : f32
    %19 = vector.broadcast %cst_15 : f32 to vector<8x128xf32>
    %20 = arith.addf %19, %18 : vector<8x128xf32>
    %21 = arith.divf %19, %20 : vector<8x128xf32>
    %22 = vector.extract_strided_slice %15 {offsets = [0, 128], sizes = [8, 128], strides = [1, 1]} : vector<8x512xf32> to vector<8x128xf32>
    %23 = arith.negf %22 : vector<8x128xf32>
    %24 = math.exp %23 : vector<8x128xf32>
    %cst_16 = arith.constant 1.000000e+00 : f32
    %25 = vector.broadcast %cst_16 : f32 to vector<8x128xf32>
    %26 = arith.addf %25, %24 : vector<8x128xf32>
    %27 = arith.divf %25, %26 : vector<8x128xf32>
    %28 = vector.extract_strided_slice %15 {offsets = [0, 256], sizes = [8, 128], strides = [1, 1]} : vector<8x512xf32> to vector<8x128xf32>
    %29 = math.tanh %28 : vector<8x128xf32>
    %30 = vector.extract_strided_slice %15 {offsets = [0, 384], sizes = [8, 128], strides = [1, 1]} : vector<8x512xf32> to vector<8x128xf32>
    %31 = arith.negf %30 : vector<8x128xf32>
    %32 = math.exp %31 : vector<8x128xf32>
    %cst_17 = arith.constant 1.000000e+00 : f32
    %33 = vector.broadcast %cst_17 : f32 to vector<8x128xf32>
    %34 = arith.addf %33, %32 : vector<8x128xf32>
    %35 = arith.divf %33, %34 : vector<8x128xf32>
    %36 = arith.mulf %27, %9 : vector<8x128xf32>
    %37 = arith.mulf %21, %29 : vector<8x128xf32>
    %38 = arith.addf %36, %37 : vector<8x128xf32>
    %39 = math.tanh %38 : vector<8x128xf32>
    %40 = arith.mulf %35, %39 : vector<8x128xf32>
    %c1_i32 = arith.constant 1 : i32
    %41 = arith.index_cast %c1_i32 : i32 to index
    %c0_18 = arith.constant 0 : index
    %c0_19 = arith.constant 0 : index
    %42 = vector.load %arg6[%41, %c0_18, %c0_19] : memref<8x8x512xf32, #tpu.memory_space<vmem>>, vector<1x8x512xf32>
    %43 = vector.shape_cast %42 : vector<1x8x512xf32> to vector<8x512xf32>
    %c0_20 = arith.constant 0 : index
    %c0_21 = arith.constant 0 : index
    %44 = vector.load %arg4[%c0_20, %c0_21] : memref<128x512xf32, #tpu.memory_space<vmem>>, vector<128x512xf32>
    %cst_22 = arith.constant dense<0.000000e+00> : vector<8x512xf32>
    %45 = tpu.matmul %40, %44, %cst_22 {dimension_numbers = #tpu.dot_dimension_numbers<[1], [0], [0], [1], [0, 0, 1, 1], [], []>} : vector<8x128xf32>, vector<128x512xf32>, vector<8x512xf32> -> vector<8x512xf32>
    %46 = arith.addf %43, %45 : vector<8x512xf32>
    %47 = vector.extract_strided_slice %46 {offsets = [0, 0], sizes = [8, 128], strides = [1, 1]} : vector<8x512xf32> to vector<8x128xf32>
    %48 = arith.negf %47 : vector<8x128xf32>
    %49 = math.exp %48 : vector<8x128xf32>
    %cst_23 = arith.constant 1.000000e+00 : f32
    %50 = vector.broadcast %cst_23 : f32 to vector<8x128xf32>
    %51 = arith.addf %50, %49 : vector<8x128xf32>
    %52 = arith.divf %50, %51 : vector<8x128xf32>
    %53 = vector.extract_strided_slice %46 {offsets = [0, 128], sizes = [8, 128], strides = [1, 1]} : vector<8x512xf32> to vector<8x128xf32>
    %54 = arith.negf %53 : vector<8x128xf32>
    %55 = math.exp %54 : vector<8x128xf32>
    %cst_24 = arith.constant 1.000000e+00 : f32
    %56 = vector.broadcast %cst_24 : f32 to vector<8x128xf32>
    %57 = arith.addf %56, %55 : vector<8x128xf32>
    %58 = arith.divf %56, %57 : vector<8x128xf32>
    %59 = vector.extract_strided_slice %46 {offsets = [0, 256], sizes = [8, 128], strides = [1, 1]} : vector<8x512xf32> to vector<8x128xf32>
    %60 = math.tanh %59 : vector<8x128xf32>
    %61 = vector.extract_strided_slice %46 {offsets = [0, 384], sizes = [8, 128], strides = [1, 1]} : vector<8x512xf32> to vector<8x128xf32>
    %62 = arith.negf %61 : vector<8x128xf32>
    %63 = math.exp %62 : vector<8x128xf32>
    %cst_25 = arith.constant 1.000000e+00 : f32
    %64 = vector.broadcast %cst_25 : f32 to vector<8x128xf32>
    %65 = arith.addf %64, %63 : vector<8x128xf32>
    %66 = arith.divf %64, %65 : vector<8x128xf32>
    %67 = arith.mulf %58, %38 : vector<8x128xf32>
    %68 = arith.mulf %52, %60 : vector<8x128xf32>
    %69 = arith.addf %67, %68 : vector<8x128xf32>
    %70 = math.tanh %69 : vector<8x128xf32>
    %71 = arith.mulf %66, %70 : vector<8x128xf32>
    %c2_i32 = arith.constant 2 : i32
    %72 = arith.index_cast %c2_i32 : i32 to index
    %c0_26 = arith.constant 0 : index
    %c0_27 = arith.constant 0 : index
    %73 = vector.load %arg6[%72, %c0_26, %c0_27] : memref<8x8x512xf32, #tpu.memory_space<vmem>>, vector<1x8x512xf32>
    %74 = vector.shape_cast %73 : vector<1x8x512xf32> to vector<8x512xf32>
    %c0_28 = arith.constant 0 : index
    %c0_29 = arith.constant 0 : index
    %75 = vector.load %arg4[%c0_28, %c0_29] : memref<128x512xf32, #tpu.memory_space<vmem>>, vector<128x512xf32>
    %cst_30 = arith.constant dense<0.000000e+00> : vector<8x512xf32>
    %76 = tpu.matmul %71, %75, %cst_30 {dimension_numbers = #tpu.dot_dimension_numbers<[1], [0], [0], [1], [0, 0, 1, 1], [], []>} : vector<8x128xf32>, vector<128x512xf32>, vector<8x512xf32> -> vector<8x512xf32>
    %77 = arith.addf %74, %76 : vector<8x512xf32>
    %78 = vector.extract_strided_slice %77 {offsets = [0, 0], sizes = [8, 128], strides = [1, 1]} : vector<8x512xf32> to vector<8x128xf32>
    %79 = arith.negf %78 : vector<8x128xf32>
    %80 = math.exp %79 : vector<8x128xf32>
    %cst_31 = arith.constant 1.000000e+00 : f32
    %81 = vector.broadcast %cst_31 : f32 to vector<8x128xf32>
    %82 = arith.addf %81, %80 : vector<8x128xf32>
    %83 = arith.divf %81, %82 : vector<8x128xf32>
    %84 = vector.extract_strided_slice %77 {offsets = [0, 128], sizes = [8, 128], strides = [1, 1]} : vector<8x512xf32> to vector<8x128xf32>
    %85 = arith.negf %84 : vector<8x128xf32>
    %86 = math.exp %85 : vector<8x128xf32>
    %cst_32 = arith.constant 1.000000e+00 : f32
    %87 = vector.broadcast %cst_32 : f32 to vector<8x128xf32>
    %88 = arith.addf %87, %86 : vector<8x128xf32>
    %89 = arith.divf %87, %88 : vector<8x128xf32>
    %90 = vector.extract_strided_slice %77 {offsets = [0, 256], sizes = [8, 128], strides = [1, 1]} : vector<8x512xf32> to vector<8x128xf32>
    %91 = math.tanh %90 : vector<8x128xf32>
    %92 = vector.extract_strided_slice %77 {offsets = [0, 384], sizes = [8, 128], strides = [1, 1]} : vector<8x512xf32> to vector<8x128xf32>
    %93 = arith.negf %92 : vector<8x128xf32>
    %94 = math.exp %93 : vector<8x128xf32>
    %cst_33 = arith.constant 1.000000e+00 : f32
    %95 = vector.broadcast %cst_33 : f32 to vector<8x128xf32>
    %96 = arith.addf %95, %94 : vector<8x128xf32>
    %97 = arith.divf %95, %96 : vector<8x128xf32>
    %98 = arith.mulf %89, %69 : vector<8x128xf32>
    %99 = arith.mulf %83, %91 : vector<8x128xf32>
    %100 = arith.addf %98, %99 : vector<8x128xf32>
    %101 = math.tanh %100 : vector<8x128xf32>
    %102 = arith.mulf %97, %101 : vector<8x128xf32>
    %c3_i32 = arith.constant 3 : i32
    %103 = arith.index_cast %c3_i32 : i32 to index
    %c0_34 = arith.constant 0 : index
    %c0_35 = arith.constant 0 : index
    %104 = vector.load %arg6[%103, %c0_34, %c0_35] : memref<8x8x512xf32, #tpu.memory_space<vmem>>, vector<1x8x512xf32>
    %105 = vector.shape_cast %104 : vector<1x8x512xf32> to vector<8x512xf32>
    %c0_36 = arith.constant 0 : index
    %c0_37 = arith.constant 0 : index
    %106 = vector.load %arg4[%c0_36, %c0_37] : memref<128x512xf32, #tpu.memory_space<vmem>>, vector<128x512xf32>
    %cst_38 = arith.constant dense<0.000000e+00> : vector<8x512xf32>
    %107 = tpu.matmul %102, %106, %cst_38 {dimension_numbers = #tpu.dot_dimension_numbers<[1], [0], [0], [1], [0, 0, 1, 1], [], []>} : vector<8x128xf32>, vector<128x512xf32>, vector<8x512xf32> -> vector<8x512xf32>
    %108 = arith.addf %105, %107 : vector<8x512xf32>
    %109 = vector.extract_strided_slice %108 {offsets = [0, 0], sizes = [8, 128], strides = [1, 1]} : vector<8x512xf32> to vector<8x128xf32>
    %110 = arith.negf %109 : vector<8x128xf32>
    %111 = math.exp %110 : vector<8x128xf32>
    %cst_39 = arith.constant 1.000000e+00 : f32
    %112 = vector.broadcast %cst_39 : f32 to vector<8x128xf32>
    %113 = arith.addf %112, %111 : vector<8x128xf32>
    %114 = arith.divf %112, %113 : vector<8x128xf32>
    %115 = vector.extract_strided_slice %108 {offsets = [0, 128], sizes = [8, 128], strides = [1, 1]} : vector<8x512xf32> to vector<8x128xf32>
    %116 = arith.negf %115 : vector<8x128xf32>
    %117 = math.exp %116 : vector<8x128xf32>
    %cst_40 = arith.constant 1.000000e+00 : f32
    %118 = vector.broadcast %cst_40 : f32 to vector<8x128xf32>
    %119 = arith.addf %118, %117 : vector<8x128xf32>
    %120 = arith.divf %118, %119 : vector<8x128xf32>
    %121 = vector.extract_strided_slice %108 {offsets = [0, 256], sizes = [8, 128], strides = [1, 1]} : vector<8x512xf32> to vector<8x128xf32>
    %122 = math.tanh %121 : vector<8x128xf32>
    %123 = vector.extract_strided_slice %108 {offsets = [0, 384], sizes = [8, 128], strides = [1, 1]} : vector<8x512xf32> to vector<8x128xf32>
    %124 = arith.negf %123 : vector<8x128xf32>
    %125 = math.exp %124 : vector<8x128xf32>
    %cst_41 = arith.constant 1.000000e+00 : f32
    %126 = vector.broadcast %cst_41 : f32 to vector<8x128xf32>
    %127 = arith.addf %126, %125 : vector<8x128xf32>
    %128 = arith.divf %126, %127 : vector<8x128xf32>
    %129 = arith.mulf %120, %100 : vector<8x128xf32>
    %130 = arith.mulf %114, %122 : vector<8x128xf32>
    %131 = arith.addf %129, %130 : vector<8x128xf32>
    %132 = math.tanh %131 : vector<8x128xf32>
    %133 = arith.mulf %128, %132 : vector<8x128xf32>
    %c4_i32 = arith.constant 4 : i32
    %134 = arith.index_cast %c4_i32 : i32 to index
    %c0_42 = arith.constant 0 : index
    %c0_43 = arith.constant 0 : index
    %135 = vector.load %arg6[%134, %c0_42, %c0_43] : memref<8x8x512xf32, #tpu.memory_space<vmem>>, vector<1x8x512xf32>
    %136 = vector.shape_cast %135 : vector<1x8x512xf32> to vector<8x512xf32>
    %c0_44 = arith.constant 0 : index
    %c0_45 = arith.constant 0 : index
    %137 = vector.load %arg4[%c0_44, %c0_45] : memref<128x512xf32, #tpu.memory_space<vmem>>, vector<128x512xf32>
    %cst_46 = arith.constant dense<0.000000e+00> : vector<8x512xf32>
    %138 = tpu.matmul %133, %137, %cst_46 {dimension_numbers = #tpu.dot_dimension_numbers<[1], [0], [0], [1], [0, 0, 1, 1], [], []>} : vector<8x128xf32>, vector<128x512xf32>, vector<8x512xf32> -> vector<8x512xf32>
    %139 = arith.addf %136, %138 : vector<8x512xf32>
    %140 = vector.extract_strided_slice %139 {offsets = [0, 0], sizes = [8, 128], strides = [1, 1]} : vector<8x512xf32> to vector<8x128xf32>
    %141 = arith.negf %140 : vector<8x128xf32>
    %142 = math.exp %141 : vector<8x128xf32>
    %cst_47 = arith.constant 1.000000e+00 : f32
    %143 = vector.broadcast %cst_47 : f32 to vector<8x128xf32>
    %144 = arith.addf %143, %142 : vector<8x128xf32>
    %145 = arith.divf %143, %144 : vector<8x128xf32>
    %146 = vector.extract_strided_slice %139 {offsets = [0, 128], sizes = [8, 128], strides = [1, 1]} : vector<8x512xf32> to vector<8x128xf32>
    %147 = arith.negf %146 : vector<8x128xf32>
    %148 = math.exp %147 : vector<8x128xf32>
    %cst_48 = arith.constant 1.000000e+00 : f32
    %149 = vector.broadcast %cst_48 : f32 to vector<8x128xf32>
    %150 = arith.addf %149, %148 : vector<8x128xf32>
    %151 = arith.divf %149, %150 : vector<8x128xf32>
    %152 = vector.extract_strided_slice %139 {offsets = [0, 256], sizes = [8, 128], strides = [1, 1]} : vector<8x512xf32> to vector<8x128xf32>
    %153 = math.tanh %152 : vector<8x128xf32>
    %154 = vector.extract_strided_slice %139 {offsets = [0, 384], sizes = [8, 128], strides = [1, 1]} : vector<8x512xf32> to vector<8x128xf32>
    %155 = arith.negf %154 : vector<8x128xf32>
    %156 = math.exp %155 : vector<8x128xf32>
    %cst_49 = arith.constant 1.000000e+00 : f32
    %157 = vector.broadcast %cst_49 : f32 to vector<8x128xf32>
    %158 = arith.addf %157, %156 : vector<8x128xf32>
    %159 = arith.divf %157, %158 : vector<8x128xf32>
    %160 = arith.mulf %151, %131 : vector<8x128xf32>
    %161 = arith.mulf %145, %153 : vector<8x128xf32>
    %162 = arith.addf %160, %161 : vector<8x128xf32>
    %163 = math.tanh %162 : vector<8x128xf32>
    %164 = arith.mulf %159, %163 : vector<8x128xf32>
    %c5_i32 = arith.constant 5 : i32
    %165 = arith.index_cast %c5_i32 : i32 to index
    %c0_50 = arith.constant 0 : index
    %c0_51 = arith.constant 0 : index
    %166 = vector.load %arg6[%165, %c0_50, %c0_51] : memref<8x8x512xf32, #tpu.memory_space<vmem>>, vector<1x8x512xf32>
    %167 = vector.shape_cast %166 : vector<1x8x512xf32> to vector<8x512xf32>
    %c0_52 = arith.constant 0 : index
    %c0_53 = arith.constant 0 : index
    %168 = vector.load %arg4[%c0_52, %c0_53] : memref<128x512xf32, #tpu.memory_space<vmem>>, vector<128x512xf32>
    %cst_54 = arith.constant dense<0.000000e+00> : vector<8x512xf32>
    %169 = tpu.matmul %164, %168, %cst_54 {dimension_numbers = #tpu.dot_dimension_numbers<[1], [0], [0], [1], [0, 0, 1, 1], [], []>} : vector<8x128xf32>, vector<128x512xf32>, vector<8x512xf32> -> vector<8x512xf32>
    %170 = arith.addf %167, %169 : vector<8x512xf32>
    %171 = vector.extract_strided_slice %170 {offsets = [0, 0], sizes = [8, 128], strides = [1, 1]} : vector<8x512xf32> to vector<8x128xf32>
    %172 = arith.negf %171 : vector<8x128xf32>
    %173 = math.exp %172 : vector<8x128xf32>
    %cst_55 = arith.constant 1.000000e+00 : f32
    %174 = vector.broadcast %cst_55 : f32 to vector<8x128xf32>
    %175 = arith.addf %174, %173 : vector<8x128xf32>
    %176 = arith.divf %174, %175 : vector<8x128xf32>
    %177 = vector.extract_strided_slice %170 {offsets = [0, 128], sizes = [8, 128], strides = [1, 1]} : vector<8x512xf32> to vector<8x128xf32>
    %178 = arith.negf %177 : vector<8x128xf32>
    %179 = math.exp %178 : vector<8x128xf32>
    %cst_56 = arith.constant 1.000000e+00 : f32
    %180 = vector.broadcast %cst_56 : f32 to vector<8x128xf32>
    %181 = arith.addf %180, %179 : vector<8x128xf32>
    %182 = arith.divf %180, %181 : vector<8x128xf32>
    %183 = vector.extract_strided_slice %170 {offsets = [0, 256], sizes = [8, 128], strides = [1, 1]} : vector<8x512xf32> to vector<8x128xf32>
    %184 = math.tanh %183 : vector<8x128xf32>
    %185 = vector.extract_strided_slice %170 {offsets = [0, 384], sizes = [8, 128], strides = [1, 1]} : vector<8x512xf32> to vector<8x128xf32>
    %186 = arith.negf %185 : vector<8x128xf32>
    %187 = math.exp %186 : vector<8x128xf32>
    %cst_57 = arith.constant 1.000000e+00 : f32
    %188 = vector.broadcast %cst_57 : f32 to vector<8x128xf32>
    %189 = arith.addf %188, %187 : vector<8x128xf32>
    %190 = arith.divf %188, %189 : vector<8x128xf32>
    %191 = arith.mulf %182, %162 : vector<8x128xf32>
    %192 = arith.mulf %176, %184 : vector<8x128xf32>
    %193 = arith.addf %191, %192 : vector<8x128xf32>
    %194 = math.tanh %193 : vector<8x128xf32>
    %195 = arith.mulf %190, %194 : vector<8x128xf32>
    %c6_i32 = arith.constant 6 : i32
    %196 = arith.index_cast %c6_i32 : i32 to index
    %c0_58 = arith.constant 0 : index
    %c0_59 = arith.constant 0 : index
    %197 = vector.load %arg6[%196, %c0_58, %c0_59] : memref<8x8x512xf32, #tpu.memory_space<vmem>>, vector<1x8x512xf32>
    %198 = vector.shape_cast %197 : vector<1x8x512xf32> to vector<8x512xf32>
    %c0_60 = arith.constant 0 : index
    %c0_61 = arith.constant 0 : index
    %199 = vector.load %arg4[%c0_60, %c0_61] : memref<128x512xf32, #tpu.memory_space<vmem>>, vector<128x512xf32>
    %cst_62 = arith.constant dense<0.000000e+00> : vector<8x512xf32>
    %200 = tpu.matmul %195, %199, %cst_62 {dimension_numbers = #tpu.dot_dimension_numbers<[1], [0], [0], [1], [0, 0, 1, 1], [], []>} : vector<8x128xf32>, vector<128x512xf32>, vector<8x512xf32> -> vector<8x512xf32>
    %201 = arith.addf %198, %200 : vector<8x512xf32>
    %202 = vector.extract_strided_slice %201 {offsets = [0, 0], sizes = [8, 128], strides = [1, 1]} : vector<8x512xf32> to vector<8x128xf32>
    %203 = arith.negf %202 : vector<8x128xf32>
    %204 = math.exp %203 : vector<8x128xf32>
    %cst_63 = arith.constant 1.000000e+00 : f32
    %205 = vector.broadcast %cst_63 : f32 to vector<8x128xf32>
    %206 = arith.addf %205, %204 : vector<8x128xf32>
    %207 = arith.divf %205, %206 : vector<8x128xf32>
    %208 = vector.extract_strided_slice %201 {offsets = [0, 128], sizes = [8, 128], strides = [1, 1]} : vector<8x512xf32> to vector<8x128xf32>
    %209 = arith.negf %208 : vector<8x128xf32>
    %210 = math.exp %209 : vector<8x128xf32>
    %cst_64 = arith.constant 1.000000e+00 : f32
    %211 = vector.broadcast %cst_64 : f32 to vector<8x128xf32>
    %212 = arith.addf %211, %210 : vector<8x128xf32>
    %213 = arith.divf %211, %212 : vector<8x128xf32>
    %214 = vector.extract_strided_slice %201 {offsets = [0, 256], sizes = [8, 128], strides = [1, 1]} : vector<8x512xf32> to vector<8x128xf32>
    %215 = math.tanh %214 : vector<8x128xf32>
    %216 = vector.extract_strided_slice %201 {offsets = [0, 384], sizes = [8, 128], strides = [1, 1]} : vector<8x512xf32> to vector<8x128xf32>
    %217 = arith.negf %216 : vector<8x128xf32>
    %218 = math.exp %217 : vector<8x128xf32>
    %cst_65 = arith.constant 1.000000e+00 : f32
    %219 = vector.broadcast %cst_65 : f32 to vector<8x128xf32>
    %220 = arith.addf %219, %218 : vector<8x128xf32>
    %221 = arith.divf %219, %220 : vector<8x128xf32>
    %222 = arith.mulf %213, %193 : vector<8x128xf32>
    %223 = arith.mulf %207, %215 : vector<8x128xf32>
    %224 = arith.addf %222, %223 : vector<8x128xf32>
    %225 = math.tanh %224 : vector<8x128xf32>
    %226 = arith.mulf %221, %225 : vector<8x128xf32>
    %c7_i32 = arith.constant 7 : i32
    %227 = arith.index_cast %c7_i32 : i32 to index
    %c0_66 = arith.constant 0 : index
    %c0_67 = arith.constant 0 : index
    %228 = vector.load %arg6[%227, %c0_66, %c0_67] : memref<8x8x512xf32, #tpu.memory_space<vmem>>, vector<1x8x512xf32>
    %229 = vector.shape_cast %228 : vector<1x8x512xf32> to vector<8x512xf32>
    %c0_68 = arith.constant 0 : index
    %c0_69 = arith.constant 0 : index
    %230 = vector.load %arg4[%c0_68, %c0_69] : memref<128x512xf32, #tpu.memory_space<vmem>>, vector<128x512xf32>
    %cst_70 = arith.constant dense<0.000000e+00> : vector<8x512xf32>
    %231 = tpu.matmul %226, %230, %cst_70 {dimension_numbers = #tpu.dot_dimension_numbers<[1], [0], [0], [1], [0, 0, 1, 1], [], []>} : vector<8x128xf32>, vector<128x512xf32>, vector<8x512xf32> -> vector<8x512xf32>
    %232 = arith.addf %229, %231 : vector<8x512xf32>
    %233 = vector.extract_strided_slice %232 {offsets = [0, 0], sizes = [8, 128], strides = [1, 1]} : vector<8x512xf32> to vector<8x128xf32>
    %234 = arith.negf %233 : vector<8x128xf32>
    %235 = math.exp %234 : vector<8x128xf32>
    %cst_71 = arith.constant 1.000000e+00 : f32
    %236 = vector.broadcast %cst_71 : f32 to vector<8x128xf32>
    %237 = arith.addf %236, %235 : vector<8x128xf32>
    %238 = arith.divf %236, %237 : vector<8x128xf32>
    %239 = vector.extract_strided_slice %232 {offsets = [0, 128], sizes = [8, 128], strides = [1, 1]} : vector<8x512xf32> to vector<8x128xf32>
    %240 = arith.negf %239 : vector<8x128xf32>
    %241 = math.exp %240 : vector<8x128xf32>
    %cst_72 = arith.constant 1.000000e+00 : f32
    %242 = vector.broadcast %cst_72 : f32 to vector<8x128xf32>
    %243 = arith.addf %242, %241 : vector<8x128xf32>
    %244 = arith.divf %242, %243 : vector<8x128xf32>
    %245 = vector.extract_strided_slice %232 {offsets = [0, 256], sizes = [8, 128], strides = [1, 1]} : vector<8x512xf32> to vector<8x128xf32>
    %246 = math.tanh %245 : vector<8x128xf32>
    %247 = vector.extract_strided_slice %232 {offsets = [0, 384], sizes = [8, 128], strides = [1, 1]} : vector<8x512xf32> to vector<8x128xf32>
    %248 = arith.negf %247 : vector<8x128xf32>
    %249 = math.exp %248 : vector<8x128xf32>
    %cst_73 = arith.constant 1.000000e+00 : f32
    %250 = vector.broadcast %cst_73 : f32 to vector<8x128xf32>
    %251 = arith.addf %250, %249 : vector<8x128xf32>
    %252 = arith.divf %250, %251 : vector<8x128xf32>
    %253 = arith.mulf %244, %224 : vector<8x128xf32>
    %254 = arith.mulf %238, %246 : vector<8x128xf32>
    %255 = arith.addf %253, %254 : vector<8x128xf32>
    %256 = math.tanh %255 : vector<8x128xf32>
    %257 = arith.mulf %252, %256 : vector<8x128xf32>
    %c8_i32 = arith.constant 8 : i32
    %c0_74 = arith.constant 0 : index
    %c0_75 = arith.constant 0 : index
    %258 = vector.load %arg5[%c0_74, %c0_75] : memref<8x128xf32, #tpu.memory_space<vmem>>, vector<8x128xf32>
    tpu.vector_store %arg5[%c0_74, %c0_75], %257 {strides = array<i32>} : memref<8x128xf32, #tpu.memory_space<vmem>>, vector<8x128xf32>,
    return
  }
  func.func @transform_0(%arg0: i32) -> (i32, i32, i32) {
    %c0_i32 = arith.constant 0 : i32
    %c0_i32_0 = arith.constant 0 : i32
    %c0_i32_1 = arith.constant 0 : i32
    return %c0_i32, %arg0, %c0_i32_0 : i32, i32, i32
  }
  func.func @transform_1(%arg0: i32) -> (i32, i32) {
    %c0_i32 = arith.constant 0 : i32
    %c0_i32_0 = arith.constant 0 : i32
    %c0_i32_1 = arith.constant 0 : i32
    return %c0_i32, %c0_i32_0 : i32, i32
  }
  func.func @transform_2(%arg0: i32) -> (i32, i32) {
    %c0_i32 = arith.constant 0 : i32
    %c0_i32_0 = arith.constant 0 : i32
    %c0_i32_1 = arith.constant 0 : i32
    return %c0_i32, %c0_i32_0 : i32, i32
  }
  func.func @transform_3(%arg0: i32) -> (i32, i32) {
    %c0_i32 = arith.constant 0 : i32
    %c0_i32_0 = arith.constant 0 : i32
    %c0_i32_1 = arith.constant 0 : i32
    return %c0_i32, %c0_i32_0 : i32, i32
  }
  func.func @transform_4(%arg0: i32) -> (i32, i32) {
    %c0_i32 = arith.constant 0 : i32
    %c0_i32_0 = arith.constant 0 : i32
    return %arg0, %c0_i32 : i32, i32
  }
}

</mosaic_0001>

<llo_original>
// kernel: tpu_custom_call.1
$region0: #{tpu_custom_call.1}
  #allocation0 [shape = 'u32[]', space=smem, size = 0x4, offset = 0x4, fixed_abs, tag = 'smem constant byte address 0x4 - core index']
  #allocation1 [shape = 'u32[144,128]{1,0:T(1,128)}', space=vmem, size = 0x12000, scoped, tag = 'internal scratch']
  #allocation2 [shape = 'f32[8,8,512]{2,1,0:T(8,128)}', space=vmem, size = 0x20000, scoped, tag = 'scratch operand']
  %s0 = inlined_call_operand.hbm [shape: f32[8,8,16], index: 0, kind: input, shape index: {}]
  %s1 = inlined_call_operand.hbm [shape: f32[16,512], index: 1, kind: input, shape index: {}]
  %s2 = inlined_call_operand.vmem [shape: f32[1,512], index: 2, kind: input, shape index: {}]
  %s3 = inlined_call_operand.hbm [shape: f32[128,512], index: 3, kind: input, shape index: {}]
  %s4 = inlined_call_operand.hbm [shape: f32[8,128], index: 4, kind: output, shape index: {}]
  %s5 = sld [smem:[#allocation0]]
  $region38: #{tpu_custom_call.1} parent=0
    _
  %s7 = ssub.s32 1, %s5
  %s8 = scalar_select 0, %s7, %s5
  $region1: #{tpu_custom_call.1} parent=0
    #allocation3 [shape = 'u8[32768]{0}', space=vmem, size = 0x8000, scoped, tag = 'input window, operand 0, single buffered']
    #allocation4 [shape = 's32[1]{0}', space=sflag, size = 0x4, scoped, tag = 'scoped memory for tpu_custom_call.1']
    #allocation5 [shape = 's32[1]{0}', space=sflag, size = 0x4, scoped, tag = 'scoped memory for tpu_custom_call.1']
    #allocation6 [shape = 'u8[32768]{0}', space=vmem, size = 0x8000, scoped, tag = 'input window, operand 1, single buffered']
    #allocation7 [shape = 's32[1]{0}', space=sflag, size = 0x4, scoped, tag = 'scoped memory for tpu_custom_call.1']
    #allocation8 [shape = 'u8[262144]{0}', space=vmem, size = 0x40000, scoped, tag = 'input window, operand 3, single buffered']
    #allocation9 [shape = 'u8[4096]{0}', space=vmem, size = 0x1000, scoped, tag = 'output window, operand 0, single buffered']
    %9 = vsyncpa [#allocation4], 0
    %10 = vsyncpa [#allocation7], 0
    %11 = vsyncpa [#allocation5], 0
    // Predicated region
    $region2: #{tpu_custom_call.1} parent=1 // pred_check
      _
    $region3: #{tpu_custom_call.1} parent=1 // pred_check_branch
      %13 = sbr.rel (0) target = $region5
    $region4: #{tpu_custom_call.1} parent=1 // pred_region
      %s15 = ssub.s32 1024, 1024
      %16 = vsyncadd [#allocation4], %s15
      %s17 = sshll.u32 [#allocation3], 4
      %s18 = int_to_ptr.vmem [resolvable:$true] %s17
      %23 = dma.hbm_to_vmem [thread:$0]  %s0, 1024, %s18, [#allocation4], 128, 128, 8
    $region5: #{tpu_custom_call.1} parent=1 // pred_fallthru
      _
    // Predicated region
    $region6: #{tpu_custom_call.1} parent=1 // pred_check
      _
    $region7: #{tpu_custom_call.1} parent=1 // pred_check_branch
      %25 = sbr.rel (0) target = $region9
    $region8: #{tpu_custom_call.1} parent=1 // pred_region
      %s27 = ssub.s32 1024, 1024
      %28 = vsyncadd [#allocation7], %s27
      %s29 = sshll.u32 [#allocation6], 4
      %s30 = int_to_ptr.vmem [resolvable:$true] %s29
      %35 = dma.hbm_to_vmem [thread:$0]  %s1, 1024, %s30, [#allocation7], 512, 512, 32
    $region9: #{tpu_custom_call.1} parent=1 // pred_fallthru
      _
    // Predicated region
    $region10: #{tpu_custom_call.1} parent=1 // pred_check
      _
    $region11: #{tpu_custom_call.1} parent=1 // pred_check_branch
      %37 = sbr.rel (0) target = $region13
    $region12: #{tpu_custom_call.1} parent=1 // pred_region
      _
    $region13: #{tpu_custom_call.1} parent=1 // pred_fallthru
      _
    // Predicated region
    $region14: #{tpu_custom_call.1} parent=1 // pred_check
      _
    $region15: #{tpu_custom_call.1} parent=1 // pred_check_branch
      %39 = sbr.rel (0) target = $region17
    $region16: #{tpu_custom_call.1} parent=1 // pred_region
      %s41 = ssub.s32 8192, 8192
      %42 = vsyncadd [#allocation7], %s41
      %s43 = sshll.u32 [#allocation8], 4
      %s44 = int_to_ptr.vmem [resolvable:$true] %s43
      %49 = dma.hbm_to_vmem [thread:$0]  %s3, 8192, %s44, [#allocation7], 512, 512, 32
    $region17: #{tpu_custom_call.1} parent=1 // pred_fallthru
      _
    // Predicated region
    $region18: #{tpu_custom_call.1} parent=1 // pred_check
      _
    $region19: #{tpu_custom_call.1} parent=1 // pred_check_branch
      %51 = sbr.rel (0) target = $region21
    $region20: #{tpu_custom_call.1} parent=1 // pred_region
      %52 = dma.done [#allocation4], 1024
    $region21: #{tpu_custom_call.1} parent=1 // pred_fallthru
      _
    // Predicated region
    $region22: #{tpu_custom_call.1} parent=1 // pred_check
      _
    $region23: #{tpu_custom_call.1} parent=1 // pred_check_branch
      %54 = sbr.rel (0) target = $region25
    $region24: #{tpu_custom_call.1} parent=1 // pred_region
      %55 = dma.done [#allocation7], 1024
    $region25: #{tpu_custom_call.1} parent=1 // pred_fallthru
      _
    // Predicated region
    $region26: #{tpu_custom_call.1} parent=1 // pred_check
      _
    $region27: #{tpu_custom_call.1} parent=1 // pred_check_branch
      %57 = sbr.rel (0) target = $region29
    $region28: #{tpu_custom_call.1} parent=1 // pred_region
      %58 = dma.done [#allocation7], 8192
    $region29: #{tpu_custom_call.1} parent=1 // pred_fallthru
      _
    %v59 = vld [vmem:[#allocation3] sm:$0xff]
    %v60 = vld [vmem:[#allocation3 + $0x8] sm:$0xff]
    %v61 = vld [vmem:[#allocation3 + $0x10] sm:$0xff]
    %v62 = vld [vmem:[#allocation3 + $0x18] sm:$0xff]
    %v63 = vld [vmem:[#allocation3 + $0x20] sm:$0xff]
    %v64 = vld [vmem:[#allocation3 + $0x28] sm:$0xff]
    %v65 = vld [vmem:[#allocation3 + $0x30] sm:$0xff]
    %v66 = vld [vmem:[#allocation3 + $0x38] sm:$0xff]
    %v67 = vld [vmem:[#allocation6] sm:$0xff]
    %v68 = vld [vmem:[#allocation6 + $0x8] sm:$0xff]
    %v69 = vld [vmem:[#allocation6 + $0x10] sm:$0xff]
    %v70 = vld [vmem:[#allocation6 + $0x18] sm:$0xff]
    %v71 = vld [vmem:[#allocation6 + $0x20] sm:$0xff]
    %v72 = vld [vmem:[#allocation6 + $0x28] sm:$0xff]
    %v73 = vld [vmem:[#allocation6 + $0x30] sm:$0xff]
    %v74 = vld [vmem:[#allocation6 + $0x38] sm:$0xff]
    %v75 = vld [vmem:[%s2] sm:$0xf]
    %v77 = vlaneseq
    %v78 = vshrl.u32 %v77, 7
    %v79 = vsub.s32 0, %v78
    %v80 = vrot.slane %v75, %v79
    %v81 = vlaneseq
    %v82 = vshrl.u32 %v81, 7
    %v83 = vsub.s32 1, %v82
    %v84 = vrot.slane %v75, %v83
    %v85 = vlaneseq
    %v86 = vshrl.u32 %v85, 7
    %v87 = vsub.s32 2, %v86
    %v88 = vrot.slane %v75, %v87
    %v89 = vlaneseq
    %v90 = vshrl.u32 %v89, 7
    %v91 = vsub.s32 3, %v90
    %v92 = vrot.slane %v75, %v91
    %vm97 = vcmask 130048
    %v99 = vsel %vm97, %v59, 0
    %v102 = vsel %vm97, %v60, 0
    %v105 = vsel %vm97, %v61, 0
    %v108 = vsel %vm97, %v62, 0
    %v111 = vsel %vm97, %v63, 0
    %v114 = vsel %vm97, %v64, 0
    %v117 = vsel %vm97, %v65, 0
    %v120 = vsel %vm97, %v66, 0
    %122 = vmatprep.subr.mxu0 %v68
    %123 = vmatpush1.msra.mxu0 %v67
    %124 = vmatprep.subr.mxu0 %v72
    %125 = vmatpush1.msra.mxu0 %v71
    %126 = vmatprep.subr.mxu0 0.0
    %127 = vmatpush1.msra.mxu0 0.0
    %128 = vmatprep.subr.mxu0 0.0
    %129 = vmatpush1.msra.mxu0 0.0
    %130 = vmatprep.subr.mxu0 0.0
    %131 = vmatpush1.msra.mxu0 0.0
    %132 = vmatprep.subr.mxu0 0.0
    %133 = vmatpush1.msra.mxu0 0.0
    %134 = vmatprep.subr.mxu0 0.0
    %135 = vmatpush1.msra.mxu0 0.0
    %136 = vmatprep.subr.mxu0 0.0
    %137 = vmatpush1.msra.mxu0 0.0
    %138 = vmatprep.subr.mxu0 0.0
    %139 = vmatpush1.msra.mxu0 0.0
    %140 = vmatprep.subr.mxu0 0.0
    %141 = vmatpush1.msra.mxu0 0.0
    %142 = vmatprep.subr.mxu0 0.0
    %143 = vmatpush1.msra.mxu0 0.0
    %144 = vmatprep.subr.mxu0 0.0
    %145 = vmatpush1.msra.mxu0 0.0
    %146 = vmatprep.subr.mxu0 0.0
    %147 = vmatpush1.msra.mxu0 0.0
    %148 = vmatprep.subr.mxu0 0.0
    %149 = vmatpush1.msra.mxu0 0.0
    %150 = vmatprep.subr.mxu0 0.0
    %151 = vmatpush1.msra.mxu0 0.0
    %152 = vmatprep.subr.mxu0 0.0
    %153 = vmatpush1.msra.mxu0 0.0
    %154 = vmatprep.subr.mxu0 0.0
    %155 = vmatpush1.msra.mxu0 0.0
    %156 = vmatprep.subr.mxu0 0.0
    %157 = vmatpush1.msra.mxu0 0.0
    %158 = vmatprep.subr.mxu0 0.0
    %159 = vmatpush1.msra.mxu0 0.0
    %160 = vmatprep.subr.mxu0 0.0
    %161 = vmatpush1.msra.mxu0 0.0
    %162 = vmatprep.subr.mxu0 0.0
    %163 = vmatpush1.msra.mxu0 0.0
    %164 = vmatprep.subr.mxu0 0.0
    %165 = vmatpush1.msra.mxu0 0.0
    %166 = vmatprep.subr.mxu0 0.0
    %167 = vmatpush1.msra.mxu0 0.0
    %168 = vmatprep.subr.mxu0 0.0
    %169 = vmatpush1.msra.mxu0 0.0
    %170 = vmatprep.subr.mxu0 0.0
    %171 = vmatpush1.msra.mxu0 0.0
    %172 = vmatprep.subr.mxu0 0.0
    %173 = vmatpush1.msra.mxu0 0.0
    %174 = vmatprep.subr.mxu0 0.0
    %175 = vmatpush1.msra.mxu0 0.0
    %176 = vmatprep.subr.mxu0 0.0
    %177 = vmatpush1.msra.mxu0 0.0
    %178 = vmatprep.subr.mxu0 0.0
    %179 = vmatpush1.msra.mxu0 0.0
    %180 = vmatprep.subr.mxu0 0.0
    %181 = vmatpush1.msra.mxu0 0.0
    %182 = vmatprep.subr.mxu0 0.0
    %183 = vmatpush1.msra.mxu0 0.0
    %184 = vmatprep.subr.mxu0 0.0
    %185 = vmatpush1.msra.mxu0 0.0
    %186 = vmatprep.mubr.f32.mxu0 0.0
    %187 = vmatmul.mubr.f32.gmra.mrb[0].mxu0 %v99
    %v188 = vpop.f32.mrb[0].mxu0
    %v189 = vadd.f32 %v80, %v188
    %v190 = vpop.f32.mrb[0].mxu0
    %v191 = vadd.f32 %v84, %v190
    %192 = vmatprep.mubr.f32.mxu0 0.0
    %193 = vmatmul.mubr.f32.gmra.mrb[0].mxu0 %v102
    %v194 = vpop.f32.mrb[0].mxu0
    %v195 = vadd.f32 %v80, %v194
    %v196 = vpop.f32.mrb[0].mxu0
    %v197 = vadd.f32 %v84, %v196
    %198 = vmatprep.mubr.f32.mxu0 0.0
    %199 = vmatmul.mubr.f32.gmra.mrb[0].mxu0 %v105
    %v200 = vpop.f32.mrb[0].mxu0
    %v201 = vadd.f32 %v80, %v200
    %v202 = vpop.f32.mrb[0].mxu0
    %v203 = vadd.f32 %v84, %v202
    %204 = vmatprep.mubr.f32.mxu0 0.0
    %205 = vmatmul.mubr.f32.gmra.mrb[0].mxu0 %v108
    %v206 = vpop.f32.mrb[0].mxu0
    %v207 = vadd.f32 %v80, %v206
    %v208 = vpop.f32.mrb[0].mxu0
    %v209 = vadd.f32 %v84, %v208
    %210 = vmatprep.mubr.f32.mxu0 0.0
    %211 = vmatmul.mubr.f32.gmra.mrb[0].mxu0 %v111
    %v212 = vpop.f32.mrb[0].mxu0
    %v213 = vadd.f32 %v80, %v212
    %v214 = vpop.f32.mrb[0].mxu0
    %v215 = vadd.f32 %v84, %v214
    %216 = vmatprep.mubr.f32.mxu0 0.0
    %217 = vmatmul.mubr.f32.gmra.mrb[0].mxu0 %v114
    %v218 = vpop.f32.mrb[0].mxu0
    %v219 = vadd.f32 %v80, %v218
    %v220 = vpop.f32.mrb[0].mxu0
    %v221 = vadd.f32 %v84, %v220
    %222 = vmatprep.mubr.f32.mxu0 0.0
    %223 = vmatmul.mubr.f32.gmra.mrb[0].mxu0 %v117
    %v224 = vpop.f32.mrb[0].mxu0
    %v225 = vadd.f32 %v80, %v224
    %v226 = vpop.f32.mrb[0].mxu0
    %v227 = vadd.f32 %v84, %v226
    %228 = vmatprep.mubr.f32.mxu0 0.0
    %229 = vmatmul.mubr.f32.gmra.mrb[0].mxu0 %v120
    %v230 = vpop.f32.mrb[0].mxu0
    %v231 = vadd.f32 %v80, %v230
    %v232 = vpop.f32.mrb[0].mxu0
    %v233 = vadd.f32 %v84, %v232
    %234 = vdwg.mxu0
    %235 = vmatprep.subr.mxu0 %v70
    %236 = vmatpush1.msra.mxu0 %v69
    %237 = vmatprep.subr.mxu0 %v74
    %238 = vmatpush1.msra.mxu0 %v73
    %239 = vmatprep.subr.mxu0 0.0
    %240 = vmatpush1.msra.mxu0 0.0
    %241 = vmatprep.subr.mxu0 0.0
    %242 = vmatpush1.msra.mxu0 0.0
    %243 = vmatprep.subr.mxu0 0.0
    %244 = vmatpush1.msra.mxu0 0.0
    %245 = vmatprep.subr.mxu0 0.0
    %246 = vmatpush1.msra.mxu0 0.0
    %247 = vmatprep.subr.mxu0 0.0
    %248 = vmatpush1.msra.mxu0 0.0
    %249 = vmatprep.subr.mxu0 0.0
    %250 = vmatpush1.msra.mxu0 0.0
    %251 = vmatprep.subr.mxu0 0.0
    %252 = vmatpush1.msra.mxu0 0.0
    %253 = vmatprep.subr.mxu0 0.0
    %254 = vmatpush1.msra.mxu0 0.0
    %255 = vmatprep.subr.mxu0 0.0
    %256 = vmatpush1.msra.mxu0 0.0
    %257 = vmatprep.subr.mxu0 0.0
    %258 = vmatpush1.msra.mxu0 0.0
    %259 = vmatprep.subr.mxu0 0.0
    %260 = vmatpush1.msra.mxu0 0.0
    %261 = vmatprep.subr.mxu0 0.0
    %262 = vmatpush1.msra.mxu0 0.0
    %263 = vmatprep.subr.mxu0 0.0
    %264 = vmatpush1.msra.mxu0 0.0
    %265 = vmatprep.subr.mxu0 0.0
    %266 = vmatpush1.msra.mxu0 0.0
    %267 = vmatprep.subr.mxu0 0.0
    %268 = vmatpush1.msra.mxu0 0.0
    %269 = vmatprep.subr.mxu0 0.0
    %270 = vmatpush1.msra.mxu0 0.0
    %271 = vmatprep.subr.mxu0 0.0
    %272 = vmatpush1.msra.mxu0 0.0
    %273 = vmatprep.subr.mxu0 0.0
    %274 = vmatpush1.msra.mxu0 0.0
    %275 = vmatprep.subr.mxu0 0.0
    %276 = vmatpush1.msra.mxu0 0.0
    %277 = vmatprep.subr.mxu0 0.0
    %278 = vmatpush1.msra.mxu0 0.0
    %279 = vmatprep.subr.mxu0 0.0
    %280 = vmatpush1.msra.mxu0 0.0
    %281 = vmatprep.subr.mxu0 0.0
    %282 = vmatpush1.msra.mxu0 0.0
    %283 = vmatprep.subr.mxu0 0.0
    %284 = vmatpush1.msra.mxu0 0.0
    %285 = vmatprep.subr.mxu0 0.0
    %286 = vmatpush1.msra.mxu0 0.0
    %287 = vmatprep.subr.mxu0 0.0
    %288 = vmatpush1.msra.mxu0 0.0
    %289 = vmatprep.subr.mxu0 0.0
    %290 = vmatpush1.msra.mxu0 0.0
    %291 = vmatprep.subr.mxu0 0.0
    %292 = vmatpush1.msra.mxu0 0.0
    %293 = vmatprep.subr.mxu0 0.0
    %294 = vmatpush1.msra.mxu0 0.0
    %295 = vmatprep.subr.mxu0 0.0
    %296 = vmatpush1.msra.mxu0 0.0
    %297 = vmatprep.subr.mxu0 0.0
    %298 = vmatpush1.msra.mxu0 0.0
    %299 = vmatprep.mubr.f32.mxu0 0.0
    %300 = vmatmul.mubr.f32.gmra.mrb[0].mxu0 %v99
    %v301 = vpop.f32.mrb[0].mxu0
    %v302 = vadd.f32 %v88, %v301
    %v303 = vpop.f32.mrb[0].mxu0
    %v304 = vadd.f32 %v92, %v303
    %305 = vmatprep.mubr.f32.mxu0 0.0
    %306 = vmatmul.mubr.f32.gmra.mrb[0].mxu0 %v102
    %v307 = vpop.f32.mrb[0].mxu0
    %v308 = vadd.f32 %v88, %v307
    %v309 = vpop.f32.mrb[0].mxu0
    %v310 = vadd.f32 %v92, %v309
    %311 = vmatprep.mubr.f32.mxu0 0.0
    %312 = vmatmul.mubr.f32.gmra.mrb[0].mxu0 %v105
    %v313 = vpop.f32.mrb[0].mxu0
    %v314 = vadd.f32 %v88, %v313
    %v315 = vpop.f32.mrb[0].mxu0
    %v316 = vadd.f32 %v92, %v315
    %317 = vmatprep.mubr.f32.mxu0 0.0
    %318 = vmatmul.mubr.f32.gmra.mrb[0].mxu0 %v108
    %v319 = vpop.f32.mrb[0].mxu0
    %v320 = vadd.f32 %v88, %v319
    %v321 = vpop.f32.mrb[0].mxu0
    %v322 = vadd.f32 %v92, %v321
    %323 = vmatprep.mubr.f32.mxu0 0.0
    %324 = vmatmul.mubr.f32.gmra.mrb[0].mxu0 %v111
    %v325 = vpop.f32.mrb[0].mxu0
    %v326 = vadd.f32 %v88, %v325
    %v327 = vpop.f32.mrb[0].mxu0
    %v328 = vadd.f32 %v92, %v327
    %329 = vmatprep.mubr.f32.mxu0 0.0
    %330 = vmatmul.mubr.f32.gmra.mrb[0].mxu0 %v114
    %v331 = vpop.f32.mrb[0].mxu0
    %v332 = vadd.f32 %v88, %v331
    %v333 = vpop.f32.mrb[0].mxu0
    %v334 = vadd.f32 %v92, %v333
    %335 = vmatprep.mubr.f32.mxu0 0.0
    %336 = vmatmul.mubr.f32.gmra.mrb[0].mxu0 %v117
    %v337 = vpop.f32.mrb[0].mxu0
    %v338 = vadd.f32 %v88, %v337
    %v339 = vpop.f32.mrb[0].mxu0
    %v340 = vadd.f32 %v92, %v339
    %341 = vmatprep.mubr.f32.mxu0 0.0
    %342 = vmatmul.mubr.f32.gmra.mrb[0].mxu0 %v120
    %v343 = vpop.f32.mrb[0].mxu0
    %v344 = vadd.f32 %v88, %v343
    %v345 = vpop.f32.mrb[0].mxu0
    %v346 = vadd.f32 %v92, %v345
    %347 = vdwg.mxu0
    %348 = vst [vmem:[#allocation2] sm:$0xff] %v189
    %349 = vst [vmem:[#allocation2 + $0x8] sm:$0xff] %v191
    %350 = vst [vmem:[#allocation2 + $0x10] sm:$0xff] %v302
    %351 = vst [vmem:[#allocation2 + $0x18] sm:$0xff] %v304
    %352 = vst [vmem:[#allocation2 + $0x20] sm:$0xff] %v195
    %353 = vst [vmem:[#allocation2 + $0x28] sm:$0xff] %v197
    %354 = vst [vmem:[#allocation2 + $0x30] sm:$0xff] %v308
    %355 = vst [vmem:[#allocation2 + $0x38] sm:$0xff] %v310
    %356 = vst [vmem:[#allocation2 + $0x40] sm:$0xff] %v201
    %357 = vst [vmem:[#allocation2 + $0x48] sm:$0xff] %v203
    %358 = vst [vmem:[#allocation2 + $0x50] sm:$0xff] %v314
    %359 = vst [vmem:[#allocation2 + $0x58] sm:$0xff] %v316
    %360 = vst [vmem:[#allocation2 + $0x60] sm:$0xff] %v207
    %361 = vst [vmem:[#allocation2 + $0x68] sm:$0xff] %v209
    %362 = vst [vmem:[#allocation2 + $0x70] sm:$0xff] %v320
    %363 = vst [vmem:[#allocation2 + $0x78] sm:$0xff] %v322
    %364 = vst [vmem:[#allocation2 + $0x80] sm:$0xff] %v213
    %365 = vst [vmem:[#allocation2 + $0x88] sm:$0xff] %v215
    %366 = vst [vmem:[#allocation2 + $0x90] sm:$0xff] %v326
    %367 = vst [vmem:[#allocation2 + $0x98] sm:$0xff] %v328
    %368 = vst [vmem:[#allocation2 + $0xa0] sm:$0xff] %v219
    %369 = vst [vmem:[#allocation2 + $0xa8] sm:$0xff] %v221
    %370 = vst [vmem:[#allocation2 + $0xb0] sm:$0xff] %v332
    %371 = vst [vmem:[#allocation2 + $0xb8] sm:$0xff] %v334
    %372 = vst [vmem:[#allocation2 + $0xc0] sm:$0xff] %v225
    %373 = vst [vmem:[#allocation2 + $0xc8] sm:$0xff] %v227
    %374 = vst [vmem:[#allocation2 + $0xd0] sm:$0xff] %v338
    %375 = vst [vmem:[#allocation2 + $0xd8] sm:$0xff] %v340
    %376 = vst [vmem:[#allocation2 + $0xe0] sm:$0xff] %v231
    %377 = vst [vmem:[#allocation2 + $0xe8] sm:$0xff] %v233
    %378 = vst [vmem:[#allocation2 + $0xf0] sm:$0xff] %v344
    %379 = vst [vmem:[#allocation2 + $0xf8] sm:$0xff] %v346
    %v380 = vld [vmem:[#allocation2] sm:$0xff]
    %v381 = vld [vmem:[#allocation2 + $0x8] sm:$0xff]
    %v382 = vld [vmem:[#allocation2 + $0x10] sm:$0xff]
    %v383 = vld [vmem:[#allocation2 + $0x18] sm:$0xff]
    %v384 = vld [vmem:[#allocation8] sm:$0xff]
    %v385 = vld [vmem:[#allocation8 + $0x8] sm:$0xff]
    %v386 = vld [vmem:[#allocation8 + $0x10] sm:$0xff]
    %v387 = vld [vmem:[#allocation8 + $0x18] sm:$0xff]
    %v388 = vld [vmem:[#allocation8 + $0x20] sm:$0xff]
    %v389 = vld [vmem:[#allocation8 + $0x28] sm:$0xff]
    %v390 = vld [vmem:[#allocation8 + $0x30] sm:$0xff]
    %v391 = vld [vmem:[#allocation8 + $0x38] sm:$0xff]
    %v392 = vld [vmem:[#allocation8 + $0x40] sm:$0xff]
    %v393 = vld [vmem:[#allocation8 + $0x48] sm:$0xff]
    %v394 = vld [vmem:[#allocation8 + $0x50] sm:$0xff]
    %v395 = vld [vmem:[#allocation8 + $0x58] sm:$0xff]
    %v396 = vld [vmem:[#allocation8 + $0x60] sm:$0xff]
    %v397 = vld [vmem:[#allocation8 + $0x68] sm:$0xff]
    %v398 = vld [vmem:[#allocation8 + $0x70] sm:$0xff]
    %v399 = vld [vmem:[#allocation8 + $0x78] sm:$0xff]
    %v400 = vld [vmem:[#allocation8 + $0x80] sm:$0xff]
    %v401 = vld [vmem:[#allocation8 + $0x88] sm:$0xff]
    %v402 = vld [vmem:[#allocation8 + $0x90] sm:$0xff]
    %v403 = vld [vmem:[#allocation8 + $0x98] sm:$0xff]
    %v404 = vld [vmem:[#allocation8 + $0xa0] sm:$0xff]
    %v405 = vld [vmem:[#allocation8 + $0xa8] sm:$0xff]
    %v406 = vld [vmem:[#allocation8 + $0xb0] sm:$0xff]
    %v407 = vld [vmem:[#allocation8 + $0xb8] sm:$0xff]
    %v408 = vld [vmem:[#allocation8 + $0xc0] sm:$0xff]
    %v409 = vld [vmem:[#allocation8 + $0xc8] sm:$0xff]
    %v410 = vld [vmem:[#allocation8 + $0xd0] sm:$0xff]
    %v411 = vld [vmem:[#allocation8 + $0xd8] sm:$0xff]
    %v412 = vld [vmem:[#allocation8 + $0xe0] sm:$0xff]
    %v413 = vld [vmem:[#allocation8 + $0xe8] sm:$0xff]
    %v414 = vld [vmem:[#allocation8 + $0xf0] sm:$0xff]
    %v415 = vld [vmem:[#allocation8 + $0xf8] sm:$0xff]
    %v416 = vld [vmem:[#allocation8 + $0x100] sm:$0xff]
    %v417 = vld [vmem:[#allocation8 + $0x108] sm:$0xff]
    %v418 = vld [vmem:[#allocation8 + $0x110] sm:$0xff]
    %v419 = vld [vmem:[#allocation8 + $0x118] sm:$0xff]
    %v420 = vld [vmem:[#allocation8 + $0x120] sm:$0xff]
    %v421 = vld [vmem:[#allocation8 + $0x128] sm:$0xff]
    %v422 = vld [vmem:[#allocation8 + $0x130] sm:$0xff]
    %v423 = vld [vmem:[#allocation8 + $0x138] sm:$0xff]
    %v424 = vld [vmem:[#allocation8 + $0x140] sm:$0xff]
    %v425 = vld [vmem:[#allocation8 + $0x148] sm:$0xff]
    %v426 = vld [vmem:[#allocation8 + $0x150] sm:$0xff]
    %v427 = vld [vmem:[#allocation8 + $0x158] sm:$0xff]
    %v428 = vld [vmem:[#allocation8 + $0x160] sm:$0xff]
    %v429 = vld [vmem:[#allocation8 + $0x168] sm:$0xff]
    %v430 = vld [vmem:[#allocation8 + $0x170] sm:$0xff]
    %v431 = vld [vmem:[#allocation8 + $0x178] sm:$0xff]
    %v432 = vld [vmem:[#allocation8 + $0x180] sm:$0xff]
    %v433 = vld [vmem:[#allocation8 + $0x188] sm:$0xff]
    %v434 = vld [vmem:[#allocation8 + $0x190] sm:$0xff]
    %v435 = vld [vmem:[#allocation8 + $0x198] sm:$0xff]
    %v436 = vld [vmem:[#allocation8 + $0x1a0] sm:$0xff]
    %v437 = vld [vmem:[#allocation8 + $0x1a8] sm:$0xff]
    %v438 = vld [vmem:[#allocation8 + $0x1b0] sm:$0xff]
    %v439 = vld [vmem:[#allocation8 + $0x1b8] sm:$0xff]
    %v440 = vld [vmem:[#allocation8 + $0x1c0] sm:$0xff]
    %v441 = vld [vmem:[#allocation8 + $0x1c8] sm:$0xff]
    %v442 = vld [vmem:[#allocation8 + $0x1d0] sm:$0xff]
    %v443 = vld [vmem:[#allocation8 + $0x1d8] sm:$0xff]
    %v444 = vld [vmem:[#allocation8 + $0x1e0] sm:$0xff]
    %v445 = vld [vmem:[#allocation8 + $0x1e8] sm:$0xff]
    %v446 = vld [vmem:[#allocation8 + $0x1f0] sm:$0xff]
    %v447 = vld [vmem:[#allocation8 + $0x1f8] sm:$0xff]
    %448 = vmatprep.subr.mxu0 %v385
    %449 = vmatpush1.msra.mxu0 %v384
    %450 = vmatprep.subr.mxu0 %v389
    %451 = vmatpush1.msra.mxu0 %v388
    %452 = vmatprep.subr.mxu0 %v393
    %453 = vmatpush1.msra.mxu0 %v392
    %454 = vmatprep.subr.mxu0 %v397
    %455 = vmatpush1.msra.mxu0 %v396
    %456 = vmatprep.subr.mxu0 %v401
    %457 = vmatpush1.msra.mxu0 %v400
    %458 = vmatprep.subr.mxu0 %v405
    %459 = vmatpush1.msra.mxu0 %v404
    %460 = vmatprep.subr.mxu0 %v409
    %461 = vmatpush1.msra.mxu0 %v408
    %462 = vmatprep.subr.mxu0 %v413
    %463 = vmatpush1.msra.mxu0 %v412
    %464 = vmatprep.subr.mxu0 %v417
    %465 = vmatpush1.msra.mxu0 %v416
    %466 = vmatprep.subr.mxu0 %v421
    %467 = vmatpush1.msra.mxu0 %v420
    %468 = vmatprep.subr.mxu0 %v425
    %469 = vmatpush1.msra.mxu0 %v424
    %470 = vmatprep.subr.mxu0 %v429
    %471 = vmatpush1.msra.mxu0 %v428
    %472 = vmatprep.subr.mxu0 %v433
    %473 = vmatpush1.msra.mxu0 %v432
    %474 = vmatprep.subr.mxu0 %v437
    %475 = vmatpush1.msra.mxu0 %v436
    %476 = vmatprep.subr.mxu0 %v441
    %477 = vmatpush1.msra.mxu0 %v440
    %478 = vmatprep.subr.mxu0 %v445
    %479 = vmatpush1.msra.mxu0 %v444
    %480 = vmatprep.subr.mxu0 0.0
    %481 = vmatpush1.msra.mxu0 0.0
    %482 = vmatprep.subr.mxu0 0.0
    %483 = vmatpush1.msra.mxu0 0.0
    %484 = vmatprep.subr.mxu0 0.0
    %485 = vmatpush1.msra.mxu0 0.0
    %486 = vmatprep.subr.mxu0 0.0
    %487 = vmatpush1.msra.mxu0 0.0
    %488 = vmatprep.subr.mxu0 0.0
    %489 = vmatpush1.msra.mxu0 0.0
    %490 = vmatprep.subr.mxu0 0.0
    %491 = vmatpush1.msra.mxu0 0.0
    %492 = vmatprep.subr.mxu0 0.0
    %493 = vmatpush1.msra.mxu0 0.0
    %494 = vmatprep.subr.mxu0 0.0
    %495 = vmatpush1.msra.mxu0 0.0
    %496 = vmatprep.subr.mxu0 0.0
    %497 = vmatpush1.msra.mxu0 0.0
    %498 = vmatprep.subr.mxu0 0.0
    %499 = vmatpush1.msra.mxu0 0.0
    %500 = vmatprep.subr.mxu0 0.0
    %501 = vmatpush1.msra.mxu0 0.0
    %502 = vmatprep.subr.mxu0 0.0
    %503 = vmatpush1.msra.mxu0 0.0
    %504 = vmatprep.subr.mxu0 0.0
    %505 = vmatpush1.msra.mxu0 0.0
    %506 = vmatprep.subr.mxu0 0.0
    %507 = vmatpush1.msra.mxu0 0.0
    %508 = vmatprep.subr.mxu0 0.0
    %509 = vmatpush1.msra.mxu0 0.0
    %510 = vmatprep.subr.mxu0 0.0
    %511 = vmatpush1.msra.mxu0 0.0
    %512 = vmatprep.mubr.f32.mxu0 0.0
    %513 = vmatmul.mubr.f32.gmra.mrb[0].mxu0 0.0
    %v514 = vpop.f32.mrb[0].mxu0
    %v515 = vadd.f32 0.0, %v514
    %v516 = vpop.f32.mrb[0].mxu0
    %v517 = vadd.f32 0.0, %v516
    %518 = vdwg.mxu0
    %519 = vmatprep.subr.mxu0 %v387
    %520 = vmatpush1.msra.mxu0 %v386
    %521 = vmatprep.subr.mxu0 %v391
    %522 = vmatpush1.msra.mxu0 %v390
    %523 = vmatprep.subr.mxu0 %v395
    %524 = vmatpush1.msra.mxu0 %v394
    %525 = vmatprep.subr.mxu0 %v399
    %526 = vmatpush1.msra.mxu0 %v398
    %527 = vmatprep.subr.mxu0 %v403
    %528 = vmatpush1.msra.mxu0 %v402
    %529 = vmatprep.subr.mxu0 %v407
    %530 = vmatpush1.msra.mxu0 %v406
    %531 = vmatprep.subr.mxu0 %v411
    %532 = vmatpush1.msra.mxu0 %v410
    %533 = vmatprep.subr.mxu0 %v415
    %534 = vmatpush1.msra.mxu0 %v414
    %535 = vmatprep.subr.mxu0 %v419
    %536 = vmatpush1.msra.mxu0 %v418
    %537 = vmatprep.subr.mxu0 %v423
    %538 = vmatpush1.msra.mxu0 %v422
    %539 = vmatprep.subr.mxu0 %v427
    %540 = vmatpush1.msra.mxu0 %v426
    %541 = vmatprep.subr.mxu0 %v431
    %542 = vmatpush1.msra.mxu0 %v430
    %543 = vmatprep.subr.mxu0 %v435
    %544 = vmatpush1.msra.mxu0 %v434
    %545 = vmatprep.subr.mxu0 %v439
    %546 = vmatpush1.msra.mxu0 %v438
    %547 = vmatprep.subr.mxu0 %v443
    %548 = vmatpush1.msra.mxu0 %v442
    %549 = vmatprep.subr.mxu0 %v447
    %550 = vmatpush1.msra.mxu0 %v446
    %551 = vmatprep.subr.mxu0 0.0
    %552 = vmatpush1.msra.mxu0 0.0
    %553 = vmatprep.subr.mxu0 0.0
    %554 = vmatpush1.msra.mxu0 0.0
    %555 = vmatprep.subr.mxu0 0.0
    %556 = vmatpush1.msra.mxu0 0.0
    %557 = vmatprep.subr.mxu0 0.0
    %558 = vmatpush1.msra.mxu0 0.0
    %559 = vmatprep.subr.mxu0 0.0
    %560 = vmatpush1.msra.mxu0 0.0
    %561 = vmatprep.subr.mxu0 0.0
    %562 = vmatpush1.msra.mxu0 0.0
    %563 = vmatprep.subr.mxu0 0.0
    %564 = vmatpush1.msra.mxu0 0.0
    %565 = vmatprep.subr.mxu0 0.0
    %566 = vmatpush1.msra.mxu0 0.0
    %567 = vmatprep.subr.mxu0 0.0
    %568 = vmatpush1.msra.mxu0 0.0
    %569 = vmatprep.subr.mxu0 0.0
    %570 = vmatpush1.msra.mxu0 0.0
    %571 = vmatprep.subr.mxu0 0.0
    %572 = vmatpush1.msra.mxu0 0.0
    %573 = vmatprep.subr.mxu0 0.0
    %574 = vmatpush1.msra.mxu0 0.0
    %575 = vmatprep.subr.mxu0 0.0
    %576 = vmatpush1.msra.mxu0 0.0
    %577 = vmatprep.subr.mxu0 0.0
    %578 = vmatpush1.msra.mxu0 0.0
    %579 = vmatprep.subr.mxu0 0.0
    %580 = vmatpush1.msra.mxu0 0.0
    %581 = vmatprep.subr.mxu0 0.0
    %582 = vmatpush1.msra.mxu0 0.0
    %583 = vmatprep.mubr.f32.mxu0 0.0
    %584 = vmatmul.mubr.f32.gmra.mrb[0].mxu0 0.0
    %v585 = vpop.f32.mrb[0].mxu0
    %v586 = vadd.f32 0.0, %v585
    %v587 = vpop.f32.mrb[0].mxu0
    %v588 = vadd.f32 0.0, %v587
    %589 = vdwg.mxu0
    %v590 = vadd.f32 %v380, %v515
    %v591 = vadd.f32 %v381, %v517
    %v592 = vadd.f32 %v382, %v586
    %v593 = vadd.f32 %v383, %v588
    %v594 = vxor.u32 %v590, 2147483648
    %v595 = vmul.f32 %v594, 1.442695
    %v596 = vpow.pop %v595
    %v597 = vadd.f32 %v596, 1.0
    %v598 = vrcp.pop %v597
    %v599 = vmul.f32 1.0, %v598
    %v600 = vxor.u32 %v591, 2147483648
    %v601 = vmul.f32 %v600, 1.442695
    %v602 = vpow.pop %v601
    %v603 = vadd.f32 %v602, 1.0
    %v604 = vrcp.pop %v603
    %v605 = vmul.f32 1.0, %v604
    %v606 = vtanh.pop %v592
    %v607 = vxor.u32 %v593, 2147483648
    %v608 = vmul.f32 %v607, 1.442695
    %v609 = vpow.pop %v608
    %v610 = vadd.f32 %v609, 1.0
    %v611 = vrcp.pop %v610
    %v612 = vmul.f32 1.0, %v611
    %v613 = vmul.f32 %v605, 0.0
    %v614 = vmul.f32 %v599, %v606
    %v615 = vadd.f32 %v613, %v614
    %v616 = vtanh.pop %v615
    %v617 = vmul.f32 %v612, %v616
    %s618 = scalar_lea.vmem [#allocation2], 32
    %v619 = vld [vmem:[%s618] sm:$0xff]
    %v620 = vld [vmem:[%s618 + $0x8] sm:$0xff]
    %v621 = vld [vmem:[%s618 + $0x10] sm:$0xff]
    %v622 = vld [vmem:[%s618 + $0x18] sm:$0xff]
    %623 = vmatprep.subr.mxu0 %v385
    %624 = vmatpush1.msra.mxu0 %v384
    %625 = vmatprep.subr.mxu0 %v389
    %626 = vmatpush1.msra.mxu0 %v388
    %627 = vmatprep.subr.mxu0 %v393
    %628 = vmatpush1.msra.mxu0 %v392
    %629 = vmatprep.subr.mxu0 %v397
    %630 = vmatpush1.msra.mxu0 %v396
    %631 = vmatprep.subr.mxu0 %v401
    %632 = vmatpush1.msra.mxu0 %v400
    %633 = vmatprep.subr.mxu0 %v405
    %634 = vmatpush1.msra.mxu0 %v404
    %635 = vmatprep.subr.mxu0 %v409
    %636 = vmatpush1.msra.mxu0 %v408
    %637 = vmatprep.subr.mxu0 %v413
    %638 = vmatpush1.msra.mxu0 %v412
    %639 = vmatprep.subr.mxu0 %v417
    %640 = vmatpush1.msra.mxu0 %v416
    %641 = vmatprep.subr.mxu0 %v421
    %642 = vmatpush1.msra.mxu0 %v420
    %643 = vmatprep.subr.mxu0 %v425
    %644 = vmatpush1.msra.mxu0 %v424
    %645 = vmatprep.subr.mxu0 %v429
    %646 = vmatpush1.msra.mxu0 %v428
    %647 = vmatprep.subr.mxu0 %v433
    %648 = vmatpush1.msra.mxu0 %v432
    %649 = vmatprep.subr.mxu0 %v437
    %650 = vmatpush1.msra.mxu0 %v436
    %651 = vmatprep.subr.mxu0 %v441
    %652 = vmatpush1.msra.mxu0 %v440
    %653 = vmatprep.subr.mxu0 %v445
    %654 = vmatpush1.msra.mxu0 %v444
    %655 = vmatprep.subr.mxu0 0.0
    %656 = vmatpush1.msra.mxu0 0.0
    %657 = vmatprep.subr.mxu0 0.0
    %658 = vmatpush1.msra.mxu0 0.0
    %659 = vmatprep.subr.mxu0 0.0
    %660 = vmatpush1.msra.mxu0 0.0
    %661 = vmatprep.subr.mxu0 0.0
    %662 = vmatpush1.msra.mxu0 0.0
    %663 = vmatprep.subr.mxu0 0.0
    %664 = vmatpush1.msra.mxu0 0.0
    %665 = vmatprep.subr.mxu0 0.0
    %666 = vmatpush1.msra.mxu0 0.0
    %667 = vmatprep.subr.mxu0 0.0
    %668 = vmatpush1.msra.mxu0 0.0
    %669 = vmatprep.subr.mxu0 0.0
    %670 = vmatpush1.msra.mxu0 0.0
    %671 = vmatprep.subr.mxu0 0.0
    %672 = vmatpush1.msra.mxu0 0.0
    %673 = vmatprep.subr.mxu0 0.0
    %674 = vmatpush1.msra.mxu0 0.0
    %675 = vmatprep.subr.mxu0 0.0
    %676 = vmatpush1.msra.mxu0 0.0
    %677 = vmatprep.subr.mxu0 0.0
    %678 = vmatpush1.msra.mxu0 0.0
    %679 = vmatprep.subr.mxu0 0.0
    %680 = vmatpush1.msra.mxu0 0.0
    %681 = vmatprep.subr.mxu0 0.0
    %682 = vmatpush1.msra.mxu0 0.0
    %683 = vmatprep.subr.mxu0 0.0
    %684 = vmatpush1.msra.mxu0 0.0
    %685 = vmatprep.subr.mxu0 0.0
    %686 = vmatpush1.msra.mxu0 0.0
    %687 = vmatprep.mubr.f32.mxu0 0.0
    %688 = vmatmul.mubr.f32.gmra.mrb[0].mxu0 %v617
    %v689 = vpop.f32.mrb[0].mxu0
    %v690 = vadd.f32 0.0, %v689
    %v691 = vpop.f32.mrb[0].mxu0
    %v692 = vadd.f32 0.0, %v691
    %693 = vdwg.mxu0
    %694 = vmatprep.subr.mxu0 %v387
    %695 = vmatpush1.msra.mxu0 %v386
    %696 = vmatprep.subr.mxu0 %v391
    %697 = vmatpush1.msra.mxu0 %v390
    %698 = vmatprep.subr.mxu0 %v395
    %699 = vmatpush1.msra.mxu0 %v394
    %700 = vmatprep.subr.mxu0 %v399
    %701 = vmatpush1.msra.mxu0 %v398
    %702 = vmatprep.subr.mxu0 %v403
    %703 = vmatpush1.msra.mxu0 %v402
    %704 = vmatprep.subr.mxu0 %v407
    %705 = vmatpush1.msra.mxu0 %v406
    %706 = vmatprep.subr.mxu0 %v411
    %707 = vmatpush1.msra.mxu0 %v410
    %708 = vmatprep.subr.mxu0 %v415
    %709 = vmatpush1.msra.mxu0 %v414
    %710 = vmatprep.subr.mxu0 %v419
    %711 = vmatpush1.msra.mxu0 %v418
    %712 = vmatprep.subr.mxu0 %v423
    %713 = vmatpush1.msra.mxu0 %v422
    %714 = vmatprep.subr.mxu0 %v427
    %715 = vmatpush1.msra.mxu0 %v426
    %716 = vmatprep.subr.mxu0 %v431
    %717 = vmatpush1.msra.mxu0 %v430
    %718 = vmatprep.subr.mxu0 %v435
    %719 = vmatpush1.msra.mxu0 %v434
    %720 = vmatprep.subr.mxu0 %v439
    %721 = vmatpush1.msra.mxu0 %v438
    %722 = vmatprep.subr.mxu0 %v443
    %723 = vmatpush1.msra.mxu0 %v442
    %724 = vmatprep.subr.mxu0 %v447
    %725 = vmatpush1.msra.mxu0 %v446
    %726 = vmatprep.subr.mxu0 0.0
    %727 = vmatpush1.msra.mxu0 0.0
    %728 = vmatprep.subr.mxu0 0.0
    %729 = vmatpush1.msra.mxu0 0.0
    %730 = vmatprep.subr.mxu0 0.0
    %731 = vmatpush1.msra.mxu0 0.0
    %732 = vmatprep.subr.mxu0 0.0
    %733 = vmatpush1.msra.mxu0 0.0
    %734 = vmatprep.subr.mxu0 0.0
    %735 = vmatpush1.msra.mxu0 0.0
    %736 = vmatprep.subr.mxu0 0.0
    %737 = vmatpush1.msra.mxu0 0.0
    %738 = vmatprep.subr.mxu0 0.0
    %739 = vmatpush1.msra.mxu0 0.0
    %740 = vmatprep.subr.mxu0 0.0
    %741 = vmatpush1.msra.mxu0 0.0
    %742 = vmatprep.subr.mxu0 0.0
    %743 = vmatpush1.msra.mxu0 0.0
    %744 = vmatprep.subr.mxu0 0.0
    %745 = vmatpush1.msra.mxu0 0.0
    %746 = vmatprep.subr.mxu0 0.0
    %747 = vmatpush1.msra.mxu0 0.0
    %748 = vmatprep.subr.mxu0 0.0
    %749 = vmatpush1.msra.mxu0 0.0
    %750 = vmatprep.subr.mxu0 0.0
    %751 = vmatpush1.msra.mxu0 0.0
    %752 = vmatprep.subr.mxu0 0.0
    %753 = vmatpush1.msra.mxu0 0.0
    %754 = vmatprep.subr.mxu0 0.0
    %755 = vmatpush1.msra.mxu0 0.0
    %756 = vmatprep.subr.mxu0 0.0
    %757 = vmatpush1.msra.mxu0 0.0
    %758 = vmatprep.mubr.f32.mxu0 0.0
    %759 = vmatmul.mubr.f32.gmra.mrb[0].mxu0 %v617
    %v760 = vpop.f32.mrb[0].mxu0
    %v761 = vadd.f32 0.0, %v760
    %v762 = vpop.f32.mrb[0].mxu0
    %v763 = vadd.f32 0.0, %v762
    %764 = vdwg.mxu0
    %v765 = vadd.f32 %v619, %v690
    %v766 = vadd.f32 %v620, %v692
    %v767 = vadd.f32 %v621, %v761
    %v768 = vadd.f32 %v622, %v763
    %v769 = vxor.u32 %v765, 2147483648
    %v770 = vmul.f32 %v769, 1.442695
    %v771 = vpow.pop %v770
    %v772 = vadd.f32 %v771, 1.0
    %v773 = vrcp.pop %v772
    %v774 = vmul.f32 1.0, %v773
    %v775 = vxor.u32 %v766, 2147483648
    %v776 = vmul.f32 %v775, 1.442695
    %v777 = vpow.pop %v776
    %v778 = vadd.f32 %v777, 1.0
    %v779 = vrcp.pop %v778
    %v780 = vmul.f32 1.0, %v779
    %v781 = vtanh.pop %v767
    %v782 = vxor.u32 %v768, 2147483648
    %v783 = vmul.f32 %v782, 1.442695
    %v784 = vpow.pop %v783
    %v785 = vadd.f32 %v784, 1.0
    %v786 = vrcp.pop %v785
    %v787 = vmul.f32 1.0, %v786
    %v788 = vmul.f32 %v780, %v615
    %v789 = vmul.f32 %v774, %v781
    %v790 = vadd.f32 %v788, %v789
    %v791 = vtanh.pop %v790
    %v792 = vmul.f32 %v787, %v791
    %s793 = scalar_lea.vmem [#allocation2], 64
    %v794 = vld [vmem:[%s793] sm:$0xff]
    %v795 = vld [vmem:[%s793 + $0x8] sm:$0xff]
    %v796 = vld [vmem:[%s793 + $0x10] sm:$0xff]
    %v797 = vld [vmem:[%s793 + $0x18] sm:$0xff]
    %798 = vmatprep.subr.mxu0 %v385
    %799 = vmatpush1.msra.mxu0 %v384
    %800 = vmatprep.subr.mxu0 %v389
    %801 = vmatpush1.msra.mxu0 %v388
    %802 = vmatprep.subr.mxu0 %v393
    %803 = vmatpush1.msra.mxu0 %v392
    %804 = vmatprep.subr.mxu0 %v397
    %805 = vmatpush1.msra.mxu0 %v396
    %806 = vmatprep.subr.mxu0 %v401
    %807 = vmatpush1.msra.mxu0 %v400
    %808 = vmatprep.subr.mxu0 %v405
    %809 = vmatpush1.msra.mxu0 %v404
    %810 = vmatprep.subr.mxu0 %v409
    %811 = vmatpush1.msra.mxu0 %v408
    %812 = vmatprep.subr.mxu0 %v413
    %813 = vmatpush1.msra.mxu0 %v412
    %814 = vmatprep.subr.mxu0 %v417
    %815 = vmatpush1.msra.mxu0 %v416
    %816 = vmatprep.subr.mxu0 %v421
    %817 = vmatpush1.msra.mxu0 %v420
    %818 = vmatprep.subr.mxu0 %v425
    %819 = vmatpush1.msra.mxu0 %v424
    %820 = vmatprep.subr.mxu0 %v429
    %821 = vmatpush1.msra.mxu0 %v428
    %822 = vmatprep.subr.mxu0 %v433
    %823 = vmatpush1.msra.mxu0 %v432
    %824 = vmatprep.subr.mxu0 %v437
    %825 = vmatpush1.msra.mxu0 %v436
    %826 = vmatprep.subr.mxu0 %v441
    %827 = vmatpush1.msra.mxu0 %v440
    %828 = vmatprep.subr.mxu0 %v445
    %829 = vmatpush1.msra.mxu0 %v444
    %830 = vmatprep.subr.mxu0 0.0
    %831 = vmatpush1.msra.mxu0 0.0
    %832 = vmatprep.subr.mxu0 0.0
    %833 = vmatpush1.msra.mxu0 0.0
    %834 = vmatprep.subr.mxu0 0.0
    %835 = vmatpush1.msra.mxu0 0.0
    %836 = vmatprep.subr.mxu0 0.0
    %837 = vmatpush1.msra.mxu0 0.0
    %838 = vmatprep.subr.mxu0 0.0
    %839 = vmatpush1.msra.mxu0 0.0
    %840 = vmatprep.subr.mxu0 0.0
    %841 = vmatpush1.msra.mxu0 0.0
    %842 = vmatprep.subr.mxu0 0.0
    %843 = vmatpush1.msra.mxu0 0.0
    %844 = vmatprep.subr.mxu0 0.0
    %845 = vmatpush1.msra.mxu0 0.0
    %846 = vmatprep.subr.mxu0 0.0
    %847 = vmatpush1.msra.mxu0 0.0
    %848 = vmatprep.subr.mxu0 0.0
    %849 = vmatpush1.msra.mxu0 0.0
    %850 = vmatprep.subr.mxu0 0.0
    %851 = vmatpush1.msra.mxu0 0.0
    %852 = vmatprep.subr.mxu0 0.0
    %853 = vmatpush1.msra.mxu0 0.0
    %854 = vmatprep.subr.mxu0 0.0
    %855 = vmatpush1.msra.mxu0 0.0
    %856 = vmatprep.subr.mxu0 0.0
    %857 = vmatpush1.msra.mxu0 0.0
    %858 = vmatprep.subr.mxu0 0.0
    %859 = vmatpush1.msra.mxu0 0.0
    %860 = vmatprep.subr.mxu0 0.0
    %861 = vmatpush1.msra.mxu0 0.0
    %862 = vmatprep.mubr.f32.mxu0 0.0
    %863 = vmatmul.mubr.f32.gmra.mrb[0].mxu0 %v792
    %v864 = vpop.f32.mrb[0].mxu0
    %v865 = vadd.f32 0.0, %v864
    %v866 = vpop.f32.mrb[0].mxu0
    %v867 = vadd.f32 0.0, %v866
    %868 = vdwg.mxu0
    %869 = vmatprep.subr.mxu0 %v387
    %870 = vmatpush1.msra.mxu0 %v386
    %871 = vmatprep.subr.mxu0 %v391
    %872 = vmatpush1.msra.mxu0 %v390
    %873 = vmatprep.subr.mxu0 %v395
    %874 = vmatpush1.msra.mxu0 %v394
    %875 = vmatprep.subr.mxu0 %v399
    %876 = vmatpush1.msra.mxu0 %v398
    %877 = vmatprep.subr.mxu0 %v403
    %878 = vmatpush1.msra.mxu0 %v402
    %879 = vmatprep.subr.mxu0 %v407
    %880 = vmatpush1.msra.mxu0 %v406
    %881 = vmatprep.subr.mxu0 %v411
    %882 = vmatpush1.msra.mxu0 %v410
    %883 = vmatprep.subr.mxu0 %v415
    %884 = vmatpush1.msra.mxu0 %v414
    %885 = vmatprep.subr.mxu0 %v419
    %886 = vmatpush1.msra.mxu0 %v418
    %887 = vmatprep.subr.mxu0 %v423
    %888 = vmatpush1.msra.mxu0 %v422
    %889 = vmatprep.subr.mxu0 %v427
    %890 = vmatpush1.msra.mxu0 %v426
    %891 = vmatprep.subr.mxu0 %v431
    %892 = vmatpush1.msra.mxu0 %v430
    %893 = vmatprep.subr.mxu0 %v435
    %894 = vmatpush1.msra.mxu0 %v434
    %895 = vmatprep.subr.mxu0 %v439
    %896 = vmatpush1.msra.mxu0 %v438
    %897 = vmatprep.subr.mxu0 %v443
    %898 = vmatpush1.msra.mxu0 %v442
    %899 = vmatprep.subr.mxu0 %v447
    %900 = vmatpush1.msra.mxu0 %v446
    %901 = vmatprep.subr.mxu0 0.0
    %902 = vmatpush1.msra.mxu0 0.0
    %903 = vmatprep.subr.mxu0 0.0
    %904 = vmatpush1.msra.mxu0 0.0
    %905 = vmatprep.subr.mxu0 0.0
    %906 = vmatpush1.msra.mxu0 0.0
    %907 = vmatprep.subr.mxu0 0.0
    %908 = vmatpush1.msra.mxu0 0.0
    %909 = vmatprep.subr.mxu0 0.0
    %910 = vmatpush1.msra.mxu0 0.0
    %911 = vmatprep.subr.mxu0 0.0
    %912 = vmatpush1.msra.mxu0 0.0
    %913 = vmatprep.subr.mxu0 0.0
    %914 = vmatpush1.msra.mxu0 0.0
    %915 = vmatprep.subr.mxu0 0.0
    %916 = vmatpush1.msra.mxu0 0.0
    %917 = vmatprep.subr.mxu0 0.0
    %918 = vmatpush1.msra.mxu0 0.0
    %919 = vmatprep.subr.mxu0 0.0
    %920 = vmatpush1.msra.mxu0 0.0
    %921 = vmatprep.subr.mxu0 0.0
    %922 = vmatpush1.msra.mxu0 0.0
    %923 = vmatprep.subr.mxu0 0.0
    %924 = vmatpush1.msra.mxu0 0.0
    %925 = vmatprep.subr.mxu0 0.0
    %926 = vmatpush1.msra.mxu0 0.0
    %927 = vmatprep.subr.mxu0 0.0
    %928 = vmatpush1.msra.mxu0 0.0
    %929 = vmatprep.subr.mxu0 0.0
    %930 = vmatpush1.msra.mxu0 0.0
    %931 = vmatprep.subr.mxu0 0.0
    %932 = vmatpush1.msra.mxu0 0.0
    %933 = vmatprep.mubr.f32.mxu0 0.0
    %934 = vmatmul.mubr.f32.gmra.mrb[0].mxu0 %v792
    %v935 = vpop.f32.mrb[0].mxu0
    %v936 = vadd.f32 0.0, %v935
    %v937 = vpop.f32.mrb[0].mxu0
    %v938 = vadd.f32 0.0, %v937
    %939 = vdwg.mxu0
    %v940 = vadd.f32 %v794, %v865
    %v941 = vadd.f32 %v795, %v867
    %v942 = vadd.f32 %v796, %v936
    %v943 = vadd.f32 %v797, %v938
    %v944 = vxor.u32 %v940, 2147483648
    %v945 = vmul.f32 %v944, 1.442695
    %v946 = vpow.pop %v945
    %v947 = vadd.f32 %v946, 1.0
    %v948 = vrcp.pop %v947
    %v949 = vmul.f32 1.0, %v948
    %v950 = vxor.u32 %v941, 2147483648
    %v951 = vmul.f32 %v950, 1.442695
    %v952 = vpow.pop %v951
    %v953 = vadd.f32 %v952, 1.0
    %v954 = vrcp.pop %v953
    %v955 = vmul.f32 1.0, %v954
    %v956 = vtanh.pop %v942
    %v957 = vxor.u32 %v943, 2147483648
    %v958 = vmul.f32 %v957, 1.442695
    %v959 = vpow.pop %v958
    %v960 = vadd.f32 %v959, 1.0
    %v961 = vrcp.pop %v960
    %v962 = vmul.f32 1.0, %v961
    %v963 = vmul.f32 %v955, %v790
    %v964 = vmul.f32 %v949, %v956
    %v965 = vadd.f32 %v963, %v964
    %v966 = vtanh.pop %v965
    %v967 = vmul.f32 %v962, %v966
    %s968 = scalar_lea.vmem [#allocation2], 96
    %v969 = vld [vmem:[%s968] sm:$0xff]
    %v970 = vld [vmem:[%s968 + $0x8] sm:$0xff]
    %v971 = vld [vmem:[%s968 + $0x10] sm:$0xff]
    %v972 = vld [vmem:[%s968 + $0x18] sm:$0xff]
    %973 = vmatprep.subr.mxu0 %v385
    %974 = vmatpush1.msra.mxu0 %v384
    %975 = vmatprep.subr.mxu0 %v389
    %976 = vmatpush1.msra.mxu0 %v388
    %977 = vmatprep.subr.mxu0 %v393
    %978 = vmatpush1.msra.mxu0 %v392
    %979 = vmatprep.subr.mxu0 %v397
    %980 = vmatpush1.msra.mxu0 %v396
    %981 = vmatprep.subr.mxu0 %v401
    %982 = vmatpush1.msra.mxu0 %v400
    %983 = vmatprep.subr.mxu0 %v405
    %984 = vmatpush1.msra.mxu0 %v404
    %985 = vmatprep.subr.mxu0 %v409
    %986 = vmatpush1.msra.mxu0 %v408
    %987 = vmatprep.subr.mxu0 %v413
    %988 = vmatpush1.msra.mxu0 %v412
    %989 = vmatprep.subr.mxu0 %v417
    %990 = vmatpush1.msra.mxu0 %v416
    %991 = vmatprep.subr.mxu0 %v421
    %992 = vmatpush1.msra.mxu0 %v420
    %993 = vmatprep.subr.mxu0 %v425
    %994 = vmatpush1.msra.mxu0 %v424
    %995 = vmatprep.subr.mxu0 %v429
    %996 = vmatpush1.msra.mxu0 %v428
    %997 = vmatprep.subr.mxu0 %v433
    %998 = vmatpush1.msra.mxu0 %v432
    %999 = vmatprep.subr.mxu0 %v437
    %1000 = vmatpush1.msra.mxu0 %v436
    %1001 = vmatprep.subr.mxu0 %v441
    %1002 = vmatpush1.msra.mxu0 %v440
    %1003 = vmatprep.subr.mxu0 %v445
    %1004 = vmatpush1.msra.mxu0 %v444
    %1005 = vmatprep.subr.mxu0 0.0
    %1006 = vmatpush1.msra.mxu0 0.0
    %1007 = vmatprep.subr.mxu0 0.0
    %1008 = vmatpush1.msra.mxu0 0.0
    %1009 = vmatprep.subr.mxu0 0.0
    %1010 = vmatpush1.msra.mxu0 0.0
    %1011 = vmatprep.subr.mxu0 0.0
    %1012 = vmatpush1.msra.mxu0 0.0
    %1013 = vmatprep.subr.mxu0 0.0
    %1014 = vmatpush1.msra.mxu0 0.0
    %1015 = vmatprep.subr.mxu0 0.0
    %1016 = vmatpush1.msra.mxu0 0.0
    %1017 = vmatprep.subr.mxu0 0.0
    %1018 = vmatpush1.msra.mxu0 0.0
    %1019 = vmatprep.subr.mxu0 0.0
    %1020 = vmatpush1.msra.mxu0 0.0
    %1021 = vmatprep.subr.mxu0 0.0
    %1022 = vmatpush1.msra.mxu0 0.0
    %1023 = vmatprep.subr.mxu0 0.0
    %1024 = vmatpush1.msra.mxu0 0.0
    %1025 = vmatprep.subr.mxu0 0.0
    %1026 = vmatpush1.msra.mxu0 0.0
    %1027 = vmatprep.subr.mxu0 0.0
    %1028 = vmatpush1.msra.mxu0 0.0
    %1029 = vmatprep.subr.mxu0 0.0
    %1030 = vmatpush1.msra.mxu0 0.0
    %1031 = vmatprep.subr.mxu0 0.0
    %1032 = vmatpush1.msra.mxu0 0.0
    %1033 = vmatprep.subr.mxu0 0.0
    %1034 = vmatpush1.msra.mxu0 0.0
    %1035 = vmatprep.subr.mxu0 0.0
    %1036 = vmatpush1.msra.mxu0 0.0
    %1037 = vmatprep.mubr.f32.mxu0 0.0
    %1038 = vmatmul.mubr.f32.gmra.mrb[0].mxu0 %v967
    %v1039 = vpop.f32.mrb[0].mxu0
    %v1040 = vadd.f32 0.0, %v1039
    %v1041 = vpop.f32.mrb[0].mxu0
    %v1042 = vadd.f32 0.0, %v1041
    %1043 = vdwg.mxu0
    %1044 = vmatprep.subr.mxu0 %v387
    %1045 = vmatpush1.msra.mxu0 %v386
    %1046 = vmatprep.subr.mxu0 %v391
    %1047 = vmatpush1.msra.mxu0 %v390
    %1048 = vmatprep.subr.mxu0 %v395
    %1049 = vmatpush1.msra.mxu0 %v394
    %1050 = vmatprep.subr.mxu0 %v399
    %1051 = vmatpush1.msra.mxu0 %v398
    %1052 = vmatprep.subr.mxu0 %v403
    %1053 = vmatpush1.msra.mxu0 %v402
    %1054 = vmatprep.subr.mxu0 %v407
    %1055 = vmatpush1.msra.mxu0 %v406
    %1056 = vmatprep.subr.mxu0 %v411
    %1057 = vmatpush1.msra.mxu0 %v410
    %1058 = vmatprep.subr.mxu0 %v415
    %1059 = vmatpush1.msra.mxu0 %v414
    %1060 = vmatprep.subr.mxu0 %v419
    %1061 = vmatpush1.msra.mxu0 %v418
    %1062 = vmatprep.subr.mxu0 %v423
    %1063 = vmatpush1.msra.mxu0 %v422
    %1064 = vmatprep.subr.mxu0 %v427
    %1065 = vmatpush1.msra.mxu0 %v426
    %1066 = vmatprep.subr.mxu0 %v431
    %1067 = vmatpush1.msra.mxu0 %v430
    %1068 = vmatprep.subr.mxu0 %v435
    %1069 = vmatpush1.msra.mxu0 %v434
    %1070 = vmatprep.subr.mxu0 %v439
    %1071 = vmatpush1.msra.mxu0 %v438
    %1072 = vmatprep.subr.mxu0 %v443
    %1073 = vmatpush1.msra.mxu0 %v442
    %1074 = vmatprep.subr.mxu0 %v447
    %1075 = vmatpush1.msra.mxu0 %v446
    %1076 = vmatprep.subr.mxu0 0.0
    %1077 = vmatpush1.msra.mxu0 0.0
    %1078 = vmatprep.subr.mxu0 0.0
    %1079 = vmatpush1.msra.mxu0 0.0
    %1080 = vmatprep.subr.mxu0 0.0
    %1081 = vmatpush1.msra.mxu0 0.0
    %1082 = vmatprep.subr.mxu0 0.0
    %1083 = vmatpush1.msra.mxu0 0.0
    %1084 = vmatprep.subr.mxu0 0.0
    %1085 = vmatpush1.msra.mxu0 0.0
    %1086 = vmatprep.subr.mxu0 0.0
    %1087 = vmatpush1.msra.mxu0 0.0
    %1088 = vmatprep.subr.mxu0 0.0
    %1089 = vmatpush1.msra.mxu0 0.0
    %1090 = vmatprep.subr.mxu0 0.0
    %1091 = vmatpush1.msra.mxu0 0.0
    %1092 = vmatprep.subr.mxu0 0.0
    %1093 = vmatpush1.msra.mxu0 0.0
    %1094 = vmatprep.subr.mxu0 0.0
    %1095 = vmatpush1.msra.mxu0 0.0
    %1096 = vmatprep.subr.mxu0 0.0
    %1097 = vmatpush1.msra.mxu0 0.0
    %1098 = vmatprep.subr.mxu0 0.0
    %1099 = vmatpush1.msra.mxu0 0.0
    %1100 = vmatprep.subr.mxu0 0.0
    %1101 = vmatpush1.msra.mxu0 0.0
    %1102 = vmatprep.subr.mxu0 0.0
    %1103 = vmatpush1.msra.mxu0 0.0
    %1104 = vmatprep.subr.mxu0 0.0
    %1105 = vmatpush1.msra.mxu0 0.0
    %1106 = vmatprep.subr.mxu0 0.0
    %1107 = vmatpush1.msra.mxu0 0.0
    %1108 = vmatprep.mubr.f32.mxu0 0.0
    %1109 = vmatmul.mubr.f32.gmra.mrb[0].mxu0 %v967
    %v1110 = vpop.f32.mrb[0].mxu0
    %v1111 = vadd.f32 0.0, %v1110
    %v1112 = vpop.f32.mrb[0].mxu0
    %v1113 = vadd.f32 0.0, %v1112
    %1114 = vdwg.mxu0
    %v1115 = vadd.f32 %v969, %v1040
    %v1116 = vadd.f32 %v970, %v1042
    %v1117 = vadd.f32 %v971, %v1111
    %v1118 = vadd.f32 %v972, %v1113
    %v1119 = vxor.u32 %v1115, 2147483648
    %v1120 = vmul.f32 %v1119, 1.442695
    %v1121 = vpow.pop %v1120
    %v1122 = vadd.f32 %v1121, 1.0
    %v1123 = vrcp.pop %v1122
    %v1124 = vmul.f32 1.0, %v1123
    %v1125 = vxor.u32 %v1116, 2147483648
    %v1126 = vmul.f32 %v1125, 1.442695
    %v1127 = vpow.pop %v1126
    %v1128 = vadd.f32 %v1127, 1.0
    %v1129 = vrcp.pop %v1128
    %v1130 = vmul.f32 1.0, %v1129
    %v1131 = vtanh.pop %v1117
    %v1132 = vxor.u32 %v1118, 2147483648
    %v1133 = vmul.f32 %v1132, 1.442695
    %v1134 = vpow.pop %v1133
    %v1135 = vadd.f32 %v1134, 1.0
    %v1136 = vrcp.pop %v1135
    %v1137 = vmul.f32 1.0, %v1136
    %v1138 = vmul.f32 %v1130, %v965
    %v1139 = vmul.f32 %v1124, %v1131
    %v1140 = vadd.f32 %v1138, %v1139
    %v1141 = vtanh.pop %v1140
    %v1142 = vmul.f32 %v1137, %v1141
    %s1143 = scalar_lea.vmem [#allocation2], 128
    %v1144 = vld [vmem:[%s1143] sm:$0xff]
    %v1145 = vld [vmem:[%s1143 + $0x8] sm:$0xff]
    %v1146 = vld [vmem:[%s1143 + $0x10] sm:$0xff]
    %v1147 = vld [vmem:[%s1143 + $0x18] sm:$0xff]
    %1148 = vmatprep.subr.mxu0 %v385
    %1149 = vmatpush1.msra.mxu0 %v384
    %1150 = vmatprep.subr.mxu0 %v389
    %1151 = vmatpush1.msra.mxu0 %v388
    %1152 = vmatprep.subr.mxu0 %v393
    %1153 = vmatpush1.msra.mxu0 %v392
    %1154 = vmatprep.subr.mxu0 %v397
    %1155 = vmatpush1.msra.mxu0 %v396
    %1156 = vmatprep.subr.mxu0 %v401
    %1157 = vmatpush1.msra.mxu0 %v400
    %1158 = vmatprep.subr.mxu0 %v405
    %1159 = vmatpush1.msra.mxu0 %v404
    %1160 = vmatprep.subr.mxu0 %v409
    %1161 = vmatpush1.msra.mxu0 %v408
    %1162 = vmatprep.subr.mxu0 %v413
    %1163 = vmatpush1.msra.mxu0 %v412
    %1164 = vmatprep.subr.mxu0 %v417
    %1165 = vmatpush1.msra.mxu0 %v416
    %1166 = vmatprep.subr.mxu0 %v421
    %1167 = vmatpush1.msra.mxu0 %v420
    %1168 = vmatprep.subr.mxu0 %v425
    %1169 = vmatpush1.msra.mxu0 %v424
    %1170 = vmatprep.subr.mxu0 %v429
    %1171 = vmatpush1.msra.mxu0 %v428
    %1172 = vmatprep.subr.mxu0 %v433
    %1173 = vmatpush1.msra.mxu0 %v432
    %1174 = vmatprep.subr.mxu0 %v437
    %1175 = vmatpush1.msra.mxu0 %v436
    %1176 = vmatprep.subr.mxu0 %v441
    %1177 = vmatpush1.msra.mxu0 %v440
    %1178 = vmatprep.subr.mxu0 %v445
    %1179 = vmatpush1.msra.mxu0 %v444
    %1180 = vmatprep.subr.mxu0 0.0
    %1181 = vmatpush1.msra.mxu0 0.0
    %1182 = vmatprep.subr.mxu0 0.0
    %1183 = vmatpush1.msra.mxu0 0.0
    %1184 = vmatprep.subr.mxu0 0.0
    %1185 = vmatpush1.msra.mxu0 0.0
    %1186 = vmatprep.subr.mxu0 0.0
    %1187 = vmatpush1.msra.mxu0 0.0
    %1188 = vmatprep.subr.mxu0 0.0
    %1189 = vmatpush1.msra.mxu0 0.0
    %1190 = vmatprep.subr.mxu0 0.0
    %1191 = vmatpush1.msra.mxu0 0.0
    %1192 = vmatprep.subr.mxu0 0.0
    %1193 = vmatpush1.msra.mxu0 0.0
    %1194 = vmatprep.subr.mxu0 0.0
    %1195 = vmatpush1.msra.mxu0 0.0
    %1196 = vmatprep.subr.mxu0 0.0
    %1197 = vmatpush1.msra.mxu0 0.0
    %1198 = vmatprep.subr.mxu0 0.0
    %1199 = vmatpush1.msra.mxu0 0.0
    %1200 = vmatprep.subr.mxu0 0.0
    %1201 = vmatpush1.msra.mxu0 0.0
    %1202 = vmatprep.subr.mxu0 0.0
    %1203 = vmatpush1.msra.mxu0 0.0
    %1204 = vmatprep.subr.mxu0 0.0
    %1205 = vmatpush1.msra.mxu0 0.0
    %1206 = vmatprep.subr.mxu0 0.0
    %1207 = vmatpush1.msra.mxu0 0.0
    %1208 = vmatprep.subr.mxu0 0.0
    %1209 = vmatpush1.msra.mxu0 0.0
    %1210 = vmatprep.subr.mxu0 0.0
    %1211 = vmatpush1.msra.mxu0 0.0
    %1212 = vmatprep.mubr.f32.mxu0 0.0
    %1213 = vmatmul.mubr.f32.gmra.mrb[0].mxu0 %v1142
    %v1214 = vpop.f32.mrb[0].mxu0
    %v1215 = vadd.f32 0.0, %v1214
    %v1216 = vpop.f32.mrb[0].mxu0
    %v1217 = vadd.f32 0.0, %v1216
    %1218 = vdwg.mxu0
    %1219 = vmatprep.subr.mxu0 %v387
    %1220 = vmatpush1.msra.mxu0 %v386
    %1221 = vmatprep.subr.mxu0 %v391
    %1222 = vmatpush1.msra.mxu0 %v390
    %1223 = vmatprep.subr.mxu0 %v395
    %1224 = vmatpush1.msra.mxu0 %v394
    %1225 = vmatprep.subr.mxu0 %v399
    %1226 = vmatpush1.msra.mxu0 %v398
    %1227 = vmatprep.subr.mxu0 %v403
    %1228 = vmatpush1.msra.mxu0 %v402
    %1229 = vmatprep.subr.mxu0 %v407
    %1230 = vmatpush1.msra.mxu0 %v406
    %1231 = vmatprep.subr.mxu0 %v411
    %1232 = vmatpush1.msra.mxu0 %v410
    %1233 = vmatprep.subr.mxu0 %v415
    %1234 = vmatpush1.msra.mxu0 %v414
    %1235 = vmatprep.subr.mxu0 %v419
    %1236 = vmatpush1.msra.mxu0 %v418
    %1237 = vmatprep.subr.mxu0 %v423
    %1238 = vmatpush1.msra.mxu0 %v422
    %1239 = vmatprep.subr.mxu0 %v427
    %1240 = vmatpush1.msra.mxu0 %v426
    %1241 = vmatprep.subr.mxu0 %v431
    %1242 = vmatpush1.msra.mxu0 %v430
    %1243 = vmatprep.subr.mxu0 %v435
    %1244 = vmatpush1.msra.mxu0 %v434
    %1245 = vmatprep.subr.mxu0 %v439
    %1246 = vmatpush1.msra.mxu0 %v438
    %1247 = vmatprep.subr.mxu0 %v443
    %1248 = vmatpush1.msra.mxu0 %v442
    %1249 = vmatprep.subr.mxu0 %v447
    %1250 = vmatpush1.msra.mxu0 %v446
    %1251 = vmatprep.subr.mxu0 0.0
    %1252 = vmatpush1.msra.mxu0 0.0
    %1253 = vmatprep.subr.mxu0 0.0
    %1254 = vmatpush1.msra.mxu0 0.0
    %1255 = vmatprep.subr.mxu0 0.0
    %1256 = vmatpush1.msra.mxu0 0.0
    %1257 = vmatprep.subr.mxu0 0.0
    %1258 = vmatpush1.msra.mxu0 0.0
    %1259 = vmatprep.subr.mxu0 0.0
    %1260 = vmatpush1.msra.mxu0 0.0
    %1261 = vmatprep.subr.mxu0 0.0
    %1262 = vmatpush1.msra.mxu0 0.0
    %1263 = vmatprep.subr.mxu0 0.0
    %1264 = vmatpush1.msra.mxu0 0.0
    %1265 = vmatprep.subr.mxu0 0.0
    %1266 = vmatpush1.msra.mxu0 0.0
    %1267 = vmatprep.subr.mxu0 0.0
    %1268 = vmatpush1.msra.mxu0 0.0
    %1269 = vmatprep.subr.mxu0 0.0
    %1270 = vmatpush1.msra.mxu0 0.0
    %1271 = vmatprep.subr.mxu0 0.0
    %1272 = vmatpush1.msra.mxu0 0.0
    %1273 = vmatprep.subr.mxu0 0.0
    %1274 = vmatpush1.msra.mxu0 0.0
    %1275 = vmatprep.subr.mxu0 0.0
    %1276 = vmatpush1.msra.mxu0 0.0
    %1277 = vmatprep.subr.mxu0 0.0
    %1278 = vmatpush1.msra.mxu0 0.0
    %1279 = vmatprep.subr.mxu0 0.0
    %1280 = vmatpush1.msra.mxu0 0.0
    %1281 = vmatprep.subr.mxu0 0.0
    %1282 = vmatpush1.msra.mxu0 0.0
    %1283 = vmatprep.mubr.f32.mxu0 0.0
    %1284 = vmatmul.mubr.f32.gmra.mrb[0].mxu0 %v1142
    %v1285 = vpop.f32.mrb[0].mxu0
    %v1286 = vadd.f32 0.0, %v1285
    %v1287 = vpop.f32.mrb[0].mxu0
    %v1288 = vadd.f32 0.0, %v1287
    %1289 = vdwg.mxu0
    %v1290 = vadd.f32 %v1144, %v1215
    %v1291 = vadd.f32 %v1145, %v1217
    %v1292 = vadd.f32 %v1146, %v1286
    %v1293 = vadd.f32 %v1147, %v1288
    %v1294 = vxor.u32 %v1290, 2147483648
    %v1295 = vmul.f32 %v1294, 1.442695
    %v1296 = vpow.pop %v1295
    %v1297 = vadd.f32 %v1296, 1.0
    %v1298 = vrcp.pop %v1297
    %v1299 = vmul.f32 1.0, %v1298
    %v1300 = vxor.u32 %v1291, 2147483648
    %v1301 = vmul.f32 %v1300, 1.442695
    %v1302 = vpow.pop %v1301
    %v1303 = vadd.f32 %v1302, 1.0
    %v1304 = vrcp.pop %v1303
    %v1305 = vmul.f32 1.0, %v1304
    %v1306 = vtanh.pop %v1292
    %v1307 = vxor.u32 %v1293, 2147483648
    %v1308 = vmul.f32 %v1307, 1.442695
    %v1309 = vpow.pop %v1308
    %v1310 = vadd.f32 %v1309, 1.0
    %v1311 = vrcp.pop %v1310
    %v1312 = vmul.f32 1.0, %v1311
    %v1313 = vmul.f32 %v1305, %v1140
    %v1314 = vmul.f32 %v1299, %v1306
    %v1315 = vadd.f32 %v1313, %v1314
    %v1316 = vtanh.pop %v1315
    %v1317 = vmul.f32 %v1312, %v1316
    %s1318 = scalar_lea.vmem [#allocation2], 160
    %v1319 = vld [vmem:[%s1318] sm:$0xff]
    %v1320 = vld [vmem:[%s1318 + $0x8] sm:$0xff]
    %v1321 = vld [vmem:[%s1318 + $0x10] sm:$0xff]
    %v1322 = vld [vmem:[%s1318 + $0x18] sm:$0xff]
    %1323 = vmatprep.subr.mxu0 %v385
    %1324 = vmatpush1.msra.mxu0 %v384
    %1325 = vmatprep.subr.mxu0 %v389
    %1326 = vmatpush1.msra.mxu0 %v388
    %1327 = vmatprep.subr.mxu0 %v393
    %1328 = vmatpush1.msra.mxu0 %v392
    %1329 = vmatprep.subr.mxu0 %v397
    %1330 = vmatpush1.msra.mxu0 %v396
    %1331 = vmatprep.subr.mxu0 %v401
    %1332 = vmatpush1.msra.mxu0 %v400
    %1333 = vmatprep.subr.mxu0 %v405
    %1334 = vmatpush1.msra.mxu0 %v404
    %1335 = vmatprep.subr.mxu0 %v409
    %1336 = vmatpush1.msra.mxu0 %v408
    %1337 = vmatprep.subr.mxu0 %v413
    %1338 = vmatpush1.msra.mxu0 %v412
    %1339 = vmatprep.subr.mxu0 %v417
    %1340 = vmatpush1.msra.mxu0 %v416
    %1341 = vmatprep.subr.mxu0 %v421
    %1342 = vmatpush1.msra.mxu0 %v420
    %1343 = vmatprep.subr.mxu0 %v425
    %1344 = vmatpush1.msra.mxu0 %v424
    %1345 = vmatprep.subr.mxu0 %v429
    %1346 = vmatpush1.msra.mxu0 %v428
    %1347 = vmatprep.subr.mxu0 %v433
    %1348 = vmatpush1.msra.mxu0 %v432
    %1349 = vmatprep.subr.mxu0 %v437
    %1350 = vmatpush1.msra.mxu0 %v436
    %1351 = vmatprep.subr.mxu0 %v441
    %1352 = vmatpush1.msra.mxu0 %v440
    %1353 = vmatprep.subr.mxu0 %v445
    %1354 = vmatpush1.msra.mxu0 %v444
    %1355 = vmatprep.subr.mxu0 0.0
    %1356 = vmatpush1.msra.mxu0 0.0
    %1357 = vmatprep.subr.mxu0 0.0
    %1358 = vmatpush1.msra.mxu0 0.0
    %1359 = vmatprep.subr.mxu0 0.0
    %1360 = vmatpush1.msra.mxu0 0.0
    %1361 = vmatprep.subr.mxu0 0.0
    %1362 = vmatpush1.msra.mxu0 0.0
    %1363 = vmatprep.subr.mxu0 0.0
    %1364 = vmatpush1.msra.mxu0 0.0
    %1365 = vmatprep.subr.mxu0 0.0
    %1366 = vmatpush1.msra.mxu0 0.0
    %1367 = vmatprep.subr.mxu0 0.0
    %1368 = vmatpush1.msra.mxu0 0.0
    %1369 = vmatprep.subr.mxu0 0.0
    %1370 = vmatpush1.msra.mxu0 0.0
    %1371 = vmatprep.subr.mxu0 0.0
    %1372 = vmatpush1.msra.mxu0 0.0
    %1373 = vmatprep.subr.mxu0 0.0
    %1374 = vmatpush1.msra.mxu0 0.0
    %1375 = vmatprep.subr.mxu0 0.0
    %1376 = vmatpush1.msra.mxu0 0.0
    %1377 = vmatprep.subr.mxu0 0.0
    %1378 = vmatpush1.msra.mxu0 0.0
    %1379 = vmatprep.subr.mxu0 0.0
    %1380 = vmatpush1.msra.mxu0 0.0
    %1381 = vmatprep.subr.mxu0 0.0
    %1382 = vmatpush1.msra.mxu0 0.0
    %1383 = vmatprep.subr.mxu0 0.0
    %1384 = vmatpush1.msra.mxu0 0.0
    %1385 = vmatprep.subr.mxu0 0.0
    %1386 = vmatpush1.msra.mxu0 0.0
    %1387 = vmatprep.mubr.f32.mxu0 0.0
    %1388 = vmatmul.mubr.f32.gmra.mrb[0].mxu0 %v1317
    %v1389 = vpop.f32.mrb[0].mxu0
    %v1390 = vadd.f32 0.0, %v1389
    %v1391 = vpop.f32.mrb[0].mxu0
    %v1392 = vadd.f32 0.0, %v1391
    %1393 = vdwg.mxu0
    %1394 = vmatprep.subr.mxu0 %v387
    %1395 = vmatpush1.msra.mxu0 %v386
    %1396 = vmatprep.subr.mxu0 %v391
    %1397 = vmatpush1.msra.mxu0 %v390
    %1398 = vmatprep.subr.mxu0 %v395
    %1399 = vmatpush1.msra.mxu0 %v394
    %1400 = vmatprep.subr.mxu0 %v399
    %1401 = vmatpush1.msra.mxu0 %v398
    %1402 = vmatprep.subr.mxu0 %v403
    %1403 = vmatpush1.msra.mxu0 %v402
    %1404 = vmatprep.subr.mxu0 %v407
    %1405 = vmatpush1.msra.mxu0 %v406
    %1406 = vmatprep.subr.mxu0 %v411
    %1407 = vmatpush1.msra.mxu0 %v410
    %1408 = vmatprep.subr.mxu0 %v415
    %1409 = vmatpush1.msra.mxu0 %v414
    %1410 = vmatprep.subr.mxu0 %v419
    %1411 = vmatpush1.msra.mxu0 %v418
    %1412 = vmatprep.subr.mxu0 %v423
    %1413 = vmatpush1.msra.mxu0 %v422
    %1414 = vmatprep.subr.mxu0 %v427
    %1415 = vmatpush1.msra.mxu0 %v426
    %1416 = vmatprep.subr.mxu0 %v431
    %1417 = vmatpush1.msra.mxu0 %v430
    %1418 = vmatprep.subr.mxu0 %v435
    %1419 = vmatpush1.msra.mxu0 %v434
    %1420 = vmatprep.subr.mxu0 %v439
    %1421 = vmatpush1.msra.mxu0 %v438
    %1422 = vmatprep.subr.mxu0 %v443
    %1423 = vmatpush1.msra.mxu0 %v442
    %1424 = vmatprep.subr.mxu0 %v447
    %1425 = vmatpush1.msra.mxu0 %v446
    %1426 = vmatprep.subr.mxu0 0.0
    %1427 = vmatpush1.msra.mxu0 0.0
    %1428 = vmatprep.subr.mxu0 0.0
    %1429 = vmatpush1.msra.mxu0 0.0
    %1430 = vmatprep.subr.mxu0 0.0
    %1431 = vmatpush1.msra.mxu0 0.0
    %1432 = vmatprep.subr.mxu0 0.0
    %1433 = vmatpush1.msra.mxu0 0.0
    %1434 = vmatprep.subr.mxu0 0.0
    %1435 = vmatpush1.msra.mxu0 0.0
    %1436 = vmatprep.subr.mxu0 0.0
    %1437 = vmatpush1.msra.mxu0 0.0
    %1438 = vmatprep.subr.mxu0 0.0
    %1439 = vmatpush1.msra.mxu0 0.0
    %1440 = vmatprep.subr.mxu0 0.0
    %1441 = vmatpush1.msra.mxu0 0.0
    %1442 = vmatprep.subr.mxu0 0.0
    %1443 = vmatpush1.msra.mxu0 0.0
    %1444 = vmatprep.subr.mxu0 0.0
    %1445 = vmatpush1.msra.mxu0 0.0
    %1446 = vmatprep.subr.mxu0 0.0
    %1447 = vmatpush1.msra.mxu0 0.0
    %1448 = vmatprep.subr.mxu0 0.0
    %1449 = vmatpush1.msra.mxu0 0.0
    %1450 = vmatprep.subr.mxu0 0.0
    %1451 = vmatpush1.msra.mxu0 0.0
    %1452 = vmatprep.subr.mxu0 0.0
    %1453 = vmatpush1.msra.mxu0 0.0
    %1454 = vmatprep.subr.mxu0 0.0
    %1455 = vmatpush1.msra.mxu0 0.0
    %1456 = vmatprep.subr.mxu0 0.0
    %1457 = vmatpush1.msra.mxu0 0.0
    %1458 = vmatprep.mubr.f32.mxu0 0.0
    %1459 = vmatmul.mubr.f32.gmra.mrb[0].mxu0 %v1317
    %v1460 = vpop.f32.mrb[0].mxu0
    %v1461 = vadd.f32 0.0, %v1460
    %v1462 = vpop.f32.mrb[0].mxu0
    %v1463 = vadd.f32 0.0, %v1462
    %1464 = vdwg.mxu0
    %v1465 = vadd.f32 %v1319, %v1390
    %v1466 = vadd.f32 %v1320, %v1392
    %v1467 = vadd.f32 %v1321, %v1461
    %v1468 = vadd.f32 %v1322, %v1463
    %v1469 = vxor.u32 %v1465, 2147483648
    %v1470 = vmul.f32 %v1469, 1.442695
    %v1471 = vpow.pop %v1470
    %v1472 = vadd.f32 %v1471, 1.0
    %v1473 = vrcp.pop %v1472
    %v1474 = vmul.f32 1.0, %v1473
    %v1475 = vxor.u32 %v1466, 2147483648
    %v1476 = vmul.f32 %v1475, 1.442695
    %v1477 = vpow.pop %v1476
    %v1478 = vadd.f32 %v1477, 1.0
    %v1479 = vrcp.pop %v1478
    %v1480 = vmul.f32 1.0, %v1479
    %v1481 = vtanh.pop %v1467
    %v1482 = vxor.u32 %v1468, 2147483648
    %v1483 = vmul.f32 %v1482, 1.442695
    %v1484 = vpow.pop %v1483
    %v1485 = vadd.f32 %v1484, 1.0
    %v1486 = vrcp.pop %v1485
    %v1487 = vmul.f32 1.0, %v1486
    %v1488 = vmul.f32 %v1480, %v1315
    %v1489 = vmul.f32 %v1474, %v1481
    %v1490 = vadd.f32 %v1488, %v1489
    %v1491 = vtanh.pop %v1490
    %v1492 = vmul.f32 %v1487, %v1491
    %s1493 = scalar_lea.vmem [#allocation2], 192
    %v1494 = vld [vmem:[%s1493] sm:$0xff]
    %v1495 = vld [vmem:[%s1493 + $0x8] sm:$0xff]
    %v1496 = vld [vmem:[%s1493 + $0x10] sm:$0xff]
    %v1497 = vld [vmem:[%s1493 + $0x18] sm:$0xff]
    %1498 = vmatprep.subr.mxu0 %v385
    %1499 = vmatpush1.msra.mxu0 %v384
    %1500 = vmatprep.subr.mxu0 %v389
    %1501 = vmatpush1.msra.mxu0 %v388
    %1502 = vmatprep.subr.mxu0 %v393
    %1503 = vmatpush1.msra.mxu0 %v392
    %1504 = vmatprep.subr.mxu0 %v397
    %1505 = vmatpush1.msra.mxu0 %v396
    %1506 = vmatprep.subr.mxu0 %v401
    %1507 = vmatpush1.msra.mxu0 %v400
    %1508 = vmatprep.subr.mxu0 %v405
    %1509 = vmatpush1.msra.mxu0 %v404
    %1510 = vmatprep.subr.mxu0 %v409
    %1511 = vmatpush1.msra.mxu0 %v408
    %1512 = vmatprep.subr.mxu0 %v413
    %1513 = vmatpush1.msra.mxu0 %v412
    %1514 = vmatprep.subr.mxu0 %v417
    %1515 = vmatpush1.msra.mxu0 %v416
    %1516 = vmatprep.subr.mxu0 %v421
    %1517 = vmatpush1.msra.mxu0 %v420
    %1518 = vmatprep.subr.mxu0 %v425
    %1519 = vmatpush1.msra.mxu0 %v424
    %1520 = vmatprep.subr.mxu0 %v429
    %1521 = vmatpush1.msra.mxu0 %v428
    %1522 = vmatprep.subr.mxu0 %v433
    %1523 = vmatpush1.msra.mxu0 %v432
    %1524 = vmatprep.subr.mxu0 %v437
    %1525 = vmatpush1.msra.mxu0 %v436
    %1526 = vmatprep.subr.mxu0 %v441
    %1527 = vmatpush1.msra.mxu0 %v440
    %1528 = vmatprep.subr.mxu0 %v445
    %1529 = vmatpush1.msra.mxu0 %v444
    %1530 = vmatprep.subr.mxu0 0.0
    %1531 = vmatpush1.msra.mxu0 0.0
    %1532 = vmatprep.subr.mxu0 0.0
    %1533 = vmatpush1.msra.mxu0 0.0
    %1534 = vmatprep.subr.mxu0 0.0
    %1535 = vmatpush1.msra.mxu0 0.0
    %1536 = vmatprep.subr.mxu0 0.0
    %1537 = vmatpush1.msra.mxu0 0.0
    %1538 = vmatprep.subr.mxu0 0.0
    %1539 = vmatpush1.msra.mxu0 0.0
    %1540 = vmatprep.subr.mxu0 0.0
    %1541 = vmatpush1.msra.mxu0 0.0
    %1542 = vmatprep.subr.mxu0 0.0
    %1543 = vmatpush1.msra.mxu0 0.0
    %1544 = vmatprep.subr.mxu0 0.0
    %1545 = vmatpush1.msra.mxu0 0.0
    %1546 = vmatprep.subr.mxu0 0.0
    %1547 = vmatpush1.msra.mxu0 0.0
    %1548 = vmatprep.subr.mxu0 0.0
    %1549 = vmatpush1.msra.mxu0 0.0
    %1550 = vmatprep.subr.mxu0 0.0
    %1551 = vmatpush1.msra.mxu0 0.0
    %1552 = vmatprep.subr.mxu0 0.0
    %1553 = vmatpush1.msra.mxu0 0.0
    %1554 = vmatprep.subr.mxu0 0.0
    %1555 = vmatpush1.msra.mxu0 0.0
    %1556 = vmatprep.subr.mxu0 0.0
    %1557 = vmatpush1.msra.mxu0 0.0
    %1558 = vmatprep.subr.mxu0 0.0
    %1559 = vmatpush1.msra.mxu0 0.0
    %1560 = vmatprep.subr.mxu0 0.0
    %1561 = vmatpush1.msra.mxu0 0.0
    %1562 = vmatprep.mubr.f32.mxu0 0.0
    %1563 = vmatmul.mubr.f32.gmra.mrb[0].mxu0 %v1492
    %v1564 = vpop.f32.mrb[0].mxu0
    %v1565 = vadd.f32 0.0, %v1564
    %v1566 = vpop.f32.mrb[0].mxu0
    %v1567 = vadd.f32 0.0, %v1566
    %1568 = vdwg.mxu0
    %1569 = vmatprep.subr.mxu0 %v387
    %1570 = vmatpush1.msra.mxu0 %v386
    %1571 = vmatprep.subr.mxu0 %v391
    %1572 = vmatpush1.msra.mxu0 %v390
    %1573 = vmatprep.subr.mxu0 %v395
    %1574 = vmatpush1.msra.mxu0 %v394
    %1575 = vmatprep.subr.mxu0 %v399
    %1576 = vmatpush1.msra.mxu0 %v398
    %1577 = vmatprep.subr.mxu0 %v403
    %1578 = vmatpush1.msra.mxu0 %v402
    %1579 = vmatprep.subr.mxu0 %v407
    %1580 = vmatpush1.msra.mxu0 %v406
    %1581 = vmatprep.subr.mxu0 %v411
    %1582 = vmatpush1.msra.mxu0 %v410
    %1583 = vmatprep.subr.mxu0 %v415
    %1584 = vmatpush1.msra.mxu0 %v414
    %1585 = vmatprep.subr.mxu0 %v419
    %1586 = vmatpush1.msra.mxu0 %v418
    %1587 = vmatprep.subr.mxu0 %v423
    %1588 = vmatpush1.msra.mxu0 %v422
    %1589 = vmatprep.subr.mxu0 %v427
    %1590 = vmatpush1.msra.mxu0 %v426
    %1591 = vmatprep.subr.mxu0 %v431
    %1592 = vmatpush1.msra.mxu0 %v430
    %1593 = vmatprep.subr.mxu0 %v435
    %1594 = vmatpush1.msra.mxu0 %v434
    %1595 = vmatprep.subr.mxu0 %v439
    %1596 = vmatpush1.msra.mxu0 %v438
    %1597 = vmatprep.subr.mxu0 %v443
    %1598 = vmatpush1.msra.mxu0 %v442
    %1599 = vmatprep.subr.mxu0 %v447
    %1600 = vmatpush1.msra.mxu0 %v446
    %1601 = vmatprep.subr.mxu0 0.0
    %1602 = vmatpush1.msra.mxu0 0.0
    %1603 = vmatprep.subr.mxu0 0.0
    %1604 = vmatpush1.msra.mxu0 0.0
    %1605 = vmatprep.subr.mxu0 0.0
    %1606 = vmatpush1.msra.mxu0 0.0
    %1607 = vmatprep.subr.mxu0 0.0
    %1608 = vmatpush1.msra.mxu0 0.0
    %1609 = vmatprep.subr.mxu0 0.0
    %1610 = vmatpush1.msra.mxu0 0.0
    %1611 = vmatprep.subr.mxu0 0.0
    %1612 = vmatpush1.msra.mxu0 0.0
    %1613 = vmatprep.subr.mxu0 0.0
    %1614 = vmatpush1.msra.mxu0 0.0
    %1615 = vmatprep.subr.mxu0 0.0
    %1616 = vmatpush1.msra.mxu0 0.0
    %1617 = vmatprep.subr.mxu0 0.0
    %1618 = vmatpush1.msra.mxu0 0.0
    %1619 = vmatprep.subr.mxu0 0.0
    %1620 = vmatpush1.msra.mxu0 0.0
    %1621 = vmatprep.subr.mxu0 0.0
    %1622 = vmatpush1.msra.mxu0 0.0
    %1623 = vmatprep.subr.mxu0 0.0
    %1624 = vmatpush1.msra.mxu0 0.0
    %1625 = vmatprep.subr.mxu0 0.0
    %1626 = vmatpush1.msra.mxu0 0.0
    %1627 = vmatprep.subr.mxu0 0.0
    %1628 = vmatpush1.msra.mxu0 0.0
    %1629 = vmatprep.subr.mxu0 0.0
    %1630 = vmatpush1.msra.mxu0 0.0
    %1631 = vmatprep.subr.mxu0 0.0
    %1632 = vmatpush1.msra.mxu0 0.0
    %1633 = vmatprep.mubr.f32.mxu0 0.0
    %1634 = vmatmul.mubr.f32.gmra.mrb[0].mxu0 %v1492
    %v1635 = vpop.f32.mrb[0].mxu0
    %v1636 = vadd.f32 0.0, %v1635
    %v1637 = vpop.f32.mrb[0].mxu0
    %v1638 = vadd.f32 0.0, %v1637
    %1639 = vdwg.mxu0
    %v1640 = vadd.f32 %v1494, %v1565
    %v1641 = vadd.f32 %v1495, %v1567
    %v1642 = vadd.f32 %v1496, %v1636
    %v1643 = vadd.f32 %v1497, %v1638
    %v1644 = vxor.u32 %v1640, 2147483648
    %v1645 = vmul.f32 %v1644, 1.442695
    %v1646 = vpow.pop %v1645
    %v1647 = vadd.f32 %v1646, 1.0
    %v1648 = vrcp.pop %v1647
    %v1649 = vmul.f32 1.0, %v1648
    %v1650 = vxor.u32 %v1641, 2147483648
    %v1651 = vmul.f32 %v1650, 1.442695
    %v1652 = vpow.pop %v1651
    %v1653 = vadd.f32 %v1652, 1.0
    %v1654 = vrcp.pop %v1653
    %v1655 = vmul.f32 1.0, %v1654
    %v1656 = vtanh.pop %v1642
    %v1657 = vxor.u32 %v1643, 2147483648
    %v1658 = vmul.f32 %v1657, 1.442695
    %v1659 = vpow.pop %v1658
    %v1660 = vadd.f32 %v1659, 1.0
    %v1661 = vrcp.pop %v1660
    %v1662 = vmul.f32 1.0, %v1661
    %v1663 = vmul.f32 %v1655, %v1490
    %v1664 = vmul.f32 %v1649, %v1656
    %v1665 = vadd.f32 %v1663, %v1664
    %v1666 = vtanh.pop %v1665
    %v1667 = vmul.f32 %v1662, %v1666
    %s1668 = scalar_lea.vmem [#allocation2], 224
    %v1669 = vld [vmem:[%s1668] sm:$0xff]
    %v1670 = vld [vmem:[%s1668 + $0x8] sm:$0xff]
    %v1671 = vld [vmem:[%s1668 + $0x10] sm:$0xff]
    %v1672 = vld [vmem:[%s1668 + $0x18] sm:$0xff]
    %1673 = vmatprep.subr.mxu0 %v385
    %1674 = vmatpush1.msra.mxu0 %v384
    %1675 = vmatprep.subr.mxu0 %v389
    %1676 = vmatpush1.msra.mxu0 %v388
    %1677 = vmatprep.subr.mxu0 %v393
    %1678 = vmatpush1.msra.mxu0 %v392
    %1679 = vmatprep.subr.mxu0 %v397
    %1680 = vmatpush1.msra.mxu0 %v396
    %1681 = vmatprep.subr.mxu0 %v401
    %1682 = vmatpush1.msra.mxu0 %v400
    %1683 = vmatprep.subr.mxu0 %v405
    %1684 = vmatpush1.msra.mxu0 %v404
    %1685 = vmatprep.subr.mxu0 %v409
    %1686 = vmatpush1.msra.mxu0 %v408
    %1687 = vmatprep.subr.mxu0 %v413
    %1688 = vmatpush1.msra.mxu0 %v412
    %1689 = vmatprep.subr.mxu0 %v417
    %1690 = vmatpush1.msra.mxu0 %v416
    %1691 = vmatprep.subr.mxu0 %v421
    %1692 = vmatpush1.msra.mxu0 %v420
    %1693 = vmatprep.subr.mxu0 %v425
    %1694 = vmatpush1.msra.mxu0 %v424
    %1695 = vmatprep.subr.mxu0 %v429
    %1696 = vmatpush1.msra.mxu0 %v428
    %1697 = vmatprep.subr.mxu0 %v433
    %1698 = vmatpush1.msra.mxu0 %v432
    %1699 = vmatprep.subr.mxu0 %v437
    %1700 = vmatpush1.msra.mxu0 %v436
    %1701 = vmatprep.subr.mxu0 %v441
    %1702 = vmatpush1.msra.mxu0 %v440
    %1703 = vmatprep.subr.mxu0 %v445
    %1704 = vmatpush1.msra.mxu0 %v444
    %1705 = vmatprep.subr.mxu0 0.0
    %1706 = vmatpush1.msra.mxu0 0.0
    %1707 = vmatprep.subr.mxu0 0.0
    %1708 = vmatpush1.msra.mxu0 0.0
    %1709 = vmatprep.subr.mxu0 0.0
    %1710 = vmatpush1.msra.mxu0 0.0
    %1711 = vmatprep.subr.mxu0 0.0
    %1712 = vmatpush1.msra.mxu0 0.0
    %1713 = vmatprep.subr.mxu0 0.0
    %1714 = vmatpush1.msra.mxu0 0.0
    %1715 = vmatprep.subr.mxu0 0.0
    %1716 = vmatpush1.msra.mxu0 0.0
    %1717 = vmatprep.subr.mxu0 0.0
    %1718 = vmatpush1.msra.mxu0 0.0
    %1719 = vmatprep.subr.mxu0 0.0
    %1720 = vmatpush1.msra.mxu0 0.0
    %1721 = vmatprep.subr.mxu0 0.0
    %1722 = vmatpush1.msra.mxu0 0.0
    %1723 = vmatprep.subr.mxu0 0.0
    %1724 = vmatpush1.msra.mxu0 0.0
    %1725 = vmatprep.subr.mxu0 0.0
    %1726 = vmatpush1.msra.mxu0 0.0
    %1727 = vmatprep.subr.mxu0 0.0
    %1728 = vmatpush1.msra.mxu0 0.0
    %1729 = vmatprep.subr.mxu0 0.0
    %1730 = vmatpush1.msra.mxu0 0.0
    %1731 = vmatprep.subr.mxu0 0.0
    %1732 = vmatpush1.msra.mxu0 0.0
    %1733 = vmatprep.subr.mxu0 0.0
    %1734 = vmatpush1.msra.mxu0 0.0
    %1735 = vmatprep.subr.mxu0 0.0
    %1736 = vmatpush1.msra.mxu0 0.0
    %1737 = vmatprep.mubr.f32.mxu0 0.0
    %1738 = vmatmul.mubr.f32.gmra.mrb[0].mxu0 %v1667
    %v1739 = vpop.f32.mrb[0].mxu0
    %v1740 = vadd.f32 0.0, %v1739
    %v1741 = vpop.f32.mrb[0].mxu0
    %v1742 = vadd.f32 0.0, %v1741
    %1743 = vdwg.mxu0
    %1744 = vmatprep.subr.mxu0 %v387
    %1745 = vmatpush1.msra.mxu0 %v386
    %1746 = vmatprep.subr.mxu0 %v391
    %1747 = vmatpush1.msra.mxu0 %v390
    %1748 = vmatprep.subr.mxu0 %v395
    %1749 = vmatpush1.msra.mxu0 %v394
    %1750 = vmatprep.subr.mxu0 %v399
    %1751 = vmatpush1.msra.mxu0 %v398
    %1752 = vmatprep.subr.mxu0 %v403
    %1753 = vmatpush1.msra.mxu0 %v402
    %1754 = vmatprep.subr.mxu0 %v407
    %1755 = vmatpush1.msra.mxu0 %v406
    %1756 = vmatprep.subr.mxu0 %v411
    %1757 = vmatpush1.msra.mxu0 %v410
    %1758 = vmatprep.subr.mxu0 %v415
    %1759 = vmatpush1.msra.mxu0 %v414
    %1760 = vmatprep.subr.mxu0 %v419
    %1761 = vmatpush1.msra.mxu0 %v418
    %1762 = vmatprep.subr.mxu0 %v423
    %1763 = vmatpush1.msra.mxu0 %v422
    %1764 = vmatprep.subr.mxu0 %v427
    %1765 = vmatpush1.msra.mxu0 %v426
    %1766 = vmatprep.subr.mxu0 %v431
    %1767 = vmatpush1.msra.mxu0 %v430
    %1768 = vmatprep.subr.mxu0 %v435
    %1769 = vmatpush1.msra.mxu0 %v434
    %1770 = vmatprep.subr.mxu0 %v439
    %1771 = vmatpush1.msra.mxu0 %v438
    %1772 = vmatprep.subr.mxu0 %v443
    %1773 = vmatpush1.msra.mxu0 %v442
    %1774 = vmatprep.subr.mxu0 %v447
    %1775 = vmatpush1.msra.mxu0 %v446
    %1776 = vmatprep.subr.mxu0 0.0
    %1777 = vmatpush1.msra.mxu0 0.0
    %1778 = vmatprep.subr.mxu0 0.0
    %1779 = vmatpush1.msra.mxu0 0.0
    %1780 = vmatprep.subr.mxu0 0.0
    %1781 = vmatpush1.msra.mxu0 0.0
    %1782 = vmatprep.subr.mxu0 0.0
    %1783 = vmatpush1.msra.mxu0 0.0
    %1784 = vmatprep.subr.mxu0 0.0
    %1785 = vmatpush1.msra.mxu0 0.0
    %1786 = vmatprep.subr.mxu0 0.0
    %1787 = vmatpush1.msra.mxu0 0.0
    %1788 = vmatprep.subr.mxu0 0.0
    %1789 = vmatpush1.msra.mxu0 0.0
    %1790 = vmatprep.subr.mxu0 0.0
    %1791 = vmatpush1.msra.mxu0 0.0
    %1792 = vmatprep.subr.mxu0 0.0
    %1793 = vmatpush1.msra.mxu0 0.0
    %1794 = vmatprep.subr.mxu0 0.0
    %1795 = vmatpush1.msra.mxu0 0.0
    %1796 = vmatprep.subr.mxu0 0.0
    %1797 = vmatpush1.msra.mxu0 0.0
    %1798 = vmatprep.subr.mxu0 0.0
    %1799 = vmatpush1.msra.mxu0 0.0
    %1800 = vmatprep.subr.mxu0 0.0
    %1801 = vmatpush1.msra.mxu0 0.0
    %1802 = vmatprep.subr.mxu0 0.0
    %1803 = vmatpush1.msra.mxu0 0.0
    %1804 = vmatprep.subr.mxu0 0.0
    %1805 = vmatpush1.msra.mxu0 0.0
    %1806 = vmatprep.subr.mxu0 0.0
    %1807 = vmatpush1.msra.mxu0 0.0
    %1808 = vmatprep.mubr.f32.mxu0 0.0
    %1809 = vmatmul.mubr.f32.gmra.mrb[0].mxu0 %v1667
    %v1810 = vpop.f32.mrb[0].mxu0
    %v1811 = vadd.f32 0.0, %v1810
    %v1812 = vpop.f32.mrb[0].mxu0
    %v1813 = vadd.f32 0.0, %v1812
    %1814 = vdwg.mxu0
    %v1815 = vadd.f32 %v1669, %v1740
    %v1816 = vadd.f32 %v1670, %v1742
    %v1817 = vadd.f32 %v1671, %v1811
    %v1818 = vadd.f32 %v1672, %v1813
    %v1819 = vxor.u32 %v1815, 2147483648
    %v1820 = vmul.f32 %v1819, 1.442695
    %v1821 = vpow.pop %v1820
    %v1822 = vadd.f32 %v1821, 1.0
    %v1823 = vrcp.pop %v1822
    %v1824 = vmul.f32 1.0, %v1823
    %v1825 = vxor.u32 %v1816, 2147483648
    %v1826 = vmul.f32 %v1825, 1.442695
    %v1827 = vpow.pop %v1826
    %v1828 = vadd.f32 %v1827, 1.0
    %v1829 = vrcp.pop %v1828
    %v1830 = vmul.f32 1.0, %v1829
    %v1831 = vtanh.pop %v1817
    %v1832 = vxor.u32 %v1818, 2147483648
    %v1833 = vmul.f32 %v1832, 1.442695
    %v1834 = vpow.pop %v1833
    %v1835 = vadd.f32 %v1834, 1.0
    %v1836 = vrcp.pop %v1835
    %v1837 = vmul.f32 1.0, %v1836
    %v1838 = vmul.f32 %v1830, %v1665
    %v1839 = vmul.f32 %v1824, %v1831
    %v1840 = vadd.f32 %v1838, %v1839
    %v1841 = vtanh.pop %v1840
    %v1842 = vmul.f32 %v1837, %v1841
    %1843 = vst [vmem:[#allocation9] sm:$0xff] %v1842
    // Predicated region
    $region30: #{tpu_custom_call.1} parent=1 // pred_check
      _
    $region31: #{tpu_custom_call.1} parent=1 // pred_check_branch
      %1845 = sbr.rel (0) target = $region33
    $region32: #{tpu_custom_call.1} parent=1 // pred_region
      %s1847 = ssub.s32 128, 128
      %1848 = vsyncadd [#allocation5], %s1847
      %s1850 = sshll.u32 [#allocation9], 4
      %s1851 = int_to_ptr.vmem [resolvable:$true] %s1850
      %1853 = dma.vmem_to_hbm [thread:$0]  %s1851, 128, %s4, [#allocation5]
    $region33: #{tpu_custom_call.1} parent=1 // pred_fallthru
      _
    // Predicated region
    $region34: #{tpu_custom_call.1} parent=1 // pred_check
      _
    $region35: #{tpu_custom_call.1} parent=1 // pred_check_branch
      %1855 = sbr.rel (0) target = $region37
    $region36: #{tpu_custom_call.1} parent=1 // pred_region
      %1856 = dma.done [#allocation5], 128
    $region37: #{tpu_custom_call.1} parent=1 // pred_fallthru
      _
    %1857 = vsyncpa [#allocation4], 1
    %1858 = vsyncpa [#allocation7], 1
    %1859 = vsyncpa [#allocation5], 1

</llo_original>
